<compile_context>
chip_gen: v7x
topology: tpu7x:2x2x1
jax: 0.10.0
libtpu: 0.0.40
codegen_flags: <defaults>
</compile_context>

<pallas_src>
import jax
import jax.numpy as jnp
from jax.experimental import pallas as pl
from jax.experimental.pallas import tpu as pltpu


# ----------------------------------------------------------------------------
# Pallas kernel: SharedMLP (1x1 conv + folded BN + ReLU stack) + max over K
# ----------------------------------------------------------------------------
def _make_sa_kernel(num_layers, num_neighbors):
    K = num_neighbors

    def kernel(*refs):
        x_ref = refs[0]          # [K, C0, TM]   bf16  (centers on the lane axis)
        out_ref = refs[-1]       # [C_last, TM]  f32   (lane-dense PyTorch layout)
        params = refs[1:-1]      # (w, b) per layer; w: [c_out, c_in] bf16 (BN folded),
                                 #                   b: [c_out, 1]    f32

        def mlp(xk):
            # xk: [C0, TM] bf16 -> [C_last, TM] f32
            h = xk
            for l in range(num_layers):
                w = params[2 * l][...]
                b = params[2 * l + 1][...]
                acc = jnp.dot(w, h, preferred_element_type=jnp.float32)  # MXU
                acc = jnp.maximum(acc + b, 0.0)   # folded-BN bias + ReLU (VPU, f32)
                # TODO(synk): on v6e/v7x a bf16 epilogue (bias/ReLU/K-max) would
                # halve VALU cost; kept f32 for v5e portability.
                h = acc.astype(jnp.bfloat16) if l + 1 < num_layers else acc
            return h

        # Per-neighbor MLP with a running max: only [c, TM] stays live.
        # K is small and static -> unroll (LLO scheduler visibility).
        m = mlp(x_ref[0])
        for k in range(1, K):
            m = jnp.maximum(m, mlp(x_ref[k]))
        out_ref[...] = m.astype(out_ref.dtype)

    return kernel


def _vmem_policy():
    """Return (vmem_limit_bytes, tile_budget_bytes), generation-aware."""
    cap = None
    try:
        cap = int(pltpu.get_tpu_info().vmem_capacity_bytes)
    except Exception:
        cap = None                                  # unknown -> be conservative
    if cap is not None and cap > (64 << 20):        # v5e / v6e: 128 MiB VMEM
        return 96 << 20, 48 << 20
    return 40 << 20, 20 << 20                       # v7x-class: 64 MiB per TC


def _choose_tile_m(B, M, K, c0, channels, budget_bytes):
    """Largest center tile from {1024, 512, 256, 128} that divides M and fits
    the per-step VMEM working set; prefers an even (>=2 step) grid so the two
    v7x TensorCores both get work.  Falls back to tile = M (full extent is
    always a legal block; sub-128 M just means masked lane stores — fine for
    small demo sizes)."""
    r8 = lambda c: -(-c // 8) * 8
    r16 = lambda c: -(-c // 16) * 16
    r128 = lambda n: -(-n // 128) * 128
    c_last = channels[-1]
    pairs = list(zip([c0] + list(channels[:-1]), channels))

    def est(tm):
        tml = r128(tm)
        inp = 2 * K * r16(c0) * tml * 2                            # dbl-buffered bf16 input tile
        act = max(r8(ci) + r8(co) for ci, co in pairs) * tml * 6   # two live layer acts (f32+bf16)
        accum = r8(c_last) * tml * 4                               # running K-max accumulator
        out = 2 * r8(c_last) * tml * 4                             # dbl-buffered f32 output tile
        wts = sum(r8(co) * r16(ci) * 2 + r8(co) * 128 * 4 for ci, co in pairs)
        return inp + act + accum + out + wts

    fitting = [t for t in (1024, 512, 256, 128)
               if M % t == 0 and est(t) <= budget_bytes]
    for t in fitting:                     # prefer largest tile with an even >=2 grid
        steps = B * (M // t)
        if steps >= 2 and steps % 2 == 0:
            return t
    if fitting:
        return fitting[0]
    return M


def shared_mlp_max(grouped, weights, biases, tile_m=None):
    """grouped: [B, K, C0, M]  (bf16, centers-on-lanes)
       -> [B, C_last, M]       (f32, PyTorch channel-first layout)."""
    B, K, C0, M = grouped.shape
    num_layers = len(weights)
    channels = [int(w.shape[0]) for w in weights]
    c_last = channels[-1]

    vmem_limit, tile_budget = _vmem_policy()
    if tile_m is None:
        tile_m = _choose_tile_m(B, M, K, C0, channels, tile_budget)
    assert M % tile_m == 0

    in_specs = [pl.BlockSpec((None, K, C0, tile_m), lambda b, m: (b, 0, 0, m))]
    flat_params = []
    for w, b in zip(weights, biases):
        in_specs.append(pl.BlockSpec(w.shape, lambda b_, m_: (0, 0)))
        in_specs.append(pl.BlockSpec(b.shape, lambda b_, m_: (0, 0)))
        flat_params += [w, b]

    out = pl.pallas_call(
        _make_sa_kernel(num_layers, K),
        grid=(B, M // tile_m),
        in_specs=in_specs,
        out_specs=pl.BlockSpec((None, c_last, tile_m), lambda b, m: (b, 0, m)),
        out_shape=jax.ShapeDtypeStruct((B, c_last, M), jnp.float32),
        compiler_params=pltpu.CompilerParams(
            dimension_semantics=("parallel", "parallel"),
            vmem_limit_bytes=vmem_limit,
        ),
    )(grouped, *flat_params)
    return out                                               # [B, C_last, M]


# ----------------------------------------------------------------------------
# Plain-JAX glue: furthest point sampling, gather, ball query, grouping
# ----------------------------------------------------------------------------
def furthest_point_sample(coords, num_centers):
    """coords: [B, 3, N] -> indices [B, M] (first pick is index 0, CUDA-style).
    TODO(synk): inherently sequential data-dependent argmax; stays in plain JAX."""
    pts = jnp.transpose(coords, (0, 2, 1))                   # [B, N, 3]

    def per_batch(p):
        N = p.shape[0]

        def body(i, state):
            idxs, dists, last = state
            d = jnp.sum((p - p[last]) ** 2, axis=-1)
            dists = jnp.minimum(dists, d)
            nxt = jnp.argmax(dists).astype(jnp.int32)
            idxs = idxs.at[i].set(nxt)
            return idxs, dists, nxt

        idxs0 = jnp.zeros((num_centers,), jnp.int32)
        dists0 = jnp.full((N,), 1e10, jnp.float32)
        idxs, _, _ = jax.lax.fori_loop(1, num_centers, body,
                                       (idxs0, dists0, jnp.int32(0)))
        return idxs

    return jax.vmap(per_batch)(pts)


def gather_points(points, indices):
    """points: [B, C, N], indices: [B, M] -> [B, C, M]."""
    return jnp.take_along_axis(points, indices[:, None, :], axis=2)


def ball_query(centers_coords, points_coords, radius, num_neighbors):
    """centers: [B, 3, M], points: [B, 3, N] -> neighbor indices [B, M, K].
    Matches the pointnet2 CUDA kernel: first K point indices (increasing) with
    squared distance < r^2; shortfall filled with the first hit; zeros if empty.
    TODO(synk): data-dependent ordered gather; stays in plain JAX."""
    c = jnp.transpose(centers_coords, (0, 2, 1))             # [B, M, 3]
    p = jnp.transpose(points_coords, (0, 2, 1))              # [B, N, 3]
    d2 = jnp.sum((c[:, :, None, :] - p[:, None, :, :]) ** 2, axis=-1)  # [B,M,N]
    within = d2 < (radius * radius)
    rank = jnp.cumsum(within.astype(jnp.int32), axis=-1) - 1

    first_idx = jnp.argmax(within, axis=-1)
    has_any = jnp.any(within, axis=-1)
    first_fill = jnp.where(has_any, first_idx, 0)

    slots = []
    for k in range(num_neighbors):
        hit = within & (rank == k)
        idx = jnp.argmax(hit, axis=-1)
        found = jnp.any(hit, axis=-1)
        slots.append(jnp.where(found, idx, first_fill))
    return jnp.stack(slots, axis=-1).astype(jnp.int32)       # [B, M, K]


def group_points_kcm(points, indices_km):
    """points: [B, C, N], indices_km: [B, K, M] -> [B, K, C, M].
    Emits the kernel layout (neighbors, channels, centers) directly so no
    wrapper-side transpose of the grouped tensor is needed."""
    gather_one = lambda p, i: p[:, i]                        # [C,N],[M] -> [C,M]
    per_batch = jax.vmap(gather_one, in_axes=(None, 0))      # -> [K,C,M]
    return jax.vmap(per_batch)(points, indices_km)


# ----------------------------------------------------------------------------
# Module wrapper (single-scale: one radius / one grouper+MLP branch)
# ----------------------------------------------------------------------------
class PointNetSAModulePallas:
    def __init__(self, num_centers, radius, num_neighbors, in_channels,
                 out_channels, include_coordinates=True, seed=0):
        assert not isinstance(radius, (list, tuple)), "single-scale demo"
        if not isinstance(out_channels, (list, tuple)):
            out_channels = [out_channels]
        self.num_centers = num_centers
        self.radius = float(radius)
        self.num_neighbors = int(num_neighbors)
        self.include_coordinates = include_coordinates
        self.out_channels = out_channels[-1]

        # Deterministic params (Conv2d 1x1 weights + BatchNorm, inference mode).
        c_prev = in_channels + (3 if include_coordinates else 0)
        key = jax.random.PRNGKey(seed)
        self.weights, self.biases = [], []
        eps = 1e-5
        for c_out in out_channels:
            key, kw = jax.random.split(key)
            # conv weight [c_out, c_prev, 1, 1] -> [c_out, c_prev]
            w = (jax.random.normal(kw, (c_out, c_prev), jnp.float32)
                 * (1.0 / jnp.sqrt(jnp.float32(c_prev))))
            gamma = jnp.ones((c_out,), jnp.float32)
            beta = jnp.full((c_out,), 0.1, jnp.float32)
            run_mean = jnp.zeros((c_out,), jnp.float32)
            run_var = jnp.ones((c_out,), jnp.float32)
            scale = gamma / jnp.sqrt(run_var + eps)
            bias = beta - run_mean * scale
            # Fold the BN scale into the conv weight (kernel epilogue = +bias,
            # ReLU) and store weights in bf16 for the MXU.
            self.weights.append((w * scale[:, None]).astype(jnp.bfloat16))
            self.biases.append(bias.reshape(c_out, 1).astype(jnp.float32))
            c_prev = c_out

    def _group(self, inputs):
        """Build the kernel input [B, K, C0, M] (bf16, centers-on-lanes) plus
        centers / indices."""
        features, coords = inputs                            # [B,C,N], [B,3,N]
        M, K = self.num_centers, self.num_neighbors

        center_indices = furthest_point_sample(coords, M)              # [B, M]
        centers_coords = gather_points(coords, center_indices)         # [B, 3, M]
        nbr_idx = ball_query(centers_coords, coords, self.radius, K)   # [B, M, K]
        idx_km = jnp.transpose(nbr_idx, (0, 2, 1))                     # [B, K, M]

        nbr_coords = group_points_kcm(coords, idx_km)                  # [B,K,3,M]
        nbr_coords = nbr_coords - centers_coords[:, None, :, :]

        if features is not None:
            nbr_feats = group_points_kcm(features, idx_km)             # [B,K,C,M]
            if self.include_coordinates:
                grouped = jnp.concatenate([nbr_coords, nbr_feats], axis=2)
            else:
                grouped = nbr_feats
        else:
            grouped = nbr_coords

        # TODO(synk): pre-applying layer 1 to the un-grouped points (commutes
        # with the gather) only pays off if the kernel is MXU-bound; skipped.
        return grouped.astype(jnp.bfloat16), centers_coords, center_indices

    def __call__(self, inputs):
        grouped, centers_coords, center_indices = self._group(inputs)
        out = shared_mlp_max(grouped, self.weights, self.biases)   # [B,Cout,M]
        return out, centers_coords, center_indices


# ----------------------------------------------------------------------------
if __name__ == "__main__":
    key = jax.random.PRNGKey(0)
    k1, k2 = jax.random.split(key)

    B, C_in, N = 2, 4, 64
    M, K = 16, 8

    coords = jax.random.uniform(k1, (B, 3, N), dtype=jnp.float32)
    features = jax.random.normal(k2, (B, C_in, N), dtype=jnp.float32)

    module = PointNetSAModulePallas(
        num_centers=M, radius=0.4, num_neighbors=K,
        in_channels=C_in, out_channels=[16, 32], include_coordinates=True)

    out_feats, centers_coords, center_indices = module((features, coords))
    out_feats, centers_coords, center_indices = jax.block_until_ready(
        (out_feats, centers_coords, center_indices))

    assert out_feats.shape == (B, 32, M), out_feats.shape
    assert centers_coords.shape == (B, 3, M), centers_coords.shape
    assert center_indices.shape == (B, M), center_indices.shape
    assert bool(jnp.all(jnp.isfinite(out_feats)))

    # Plain-JAX reference of the SharedMLP + neighbor-max path (same casts).
    grouped, _, _ = module._group((features, coords))        # [B, K, C0, M] bf16
    h = grouped
    nl = len(module.weights)
    for li, (w, b) in enumerate(zip(module.weights, module.biases)):
        acc = jnp.einsum("oc,bkcm->bkom", w, h,
                         preferred_element_type=jnp.float32)
        acc = jnp.maximum(acc + b[None, None, :, :], 0.0)
        h = acc.astype(jnp.bfloat16) if li + 1 < nl else acc
    ref = jnp.max(h, axis=1)                                 # [B, C_out, M] f32
    assert bool(jnp.allclose(out_feats, ref, atol=1e-2, rtol=1e-2)), (
        float(jnp.max(jnp.abs(out_feats - ref))))

    print("KERNEL_OK")
</pallas_src>

<mosaic_0001>
module attributes {stable_mosaic.version = 11 : i64} {
  func.func @kernel(%arg0: i32, %arg1: i32, %arg2: memref<1x8x7x16xbf16, #tpu.memory_space<vmem>>, %arg3: memref<16x7xbf16, #tpu.memory_space<vmem>>, %arg4: memref<16x1xf32, #tpu.memory_space<vmem>>, %arg5: memref<32x16xbf16, #tpu.memory_space<vmem>>, %arg6: memref<32x1xf32, #tpu.memory_space<vmem>>, %arg7: memref<1x32x16xf32, #tpu.memory_space<vmem>>) attributes {dimension_semantics = [#tpu.dimension_semantics<parallel>, #tpu.dimension_semantics<parallel>], iteration_bounds = array<i64: 2, 1>, scalar_prefetch = 0 : i64, scratch_operands = 0 : i64, tpu.core_type = #tpu.core_type<tc>, window_params = [{transform_indices = @transform_0, window_bounds = array<i64: 1, 8, 7, 16>}, {pipeline_mode = #tpu.pipeline_mode<synchronous>, transform_indices = @transform_1, window_bounds = array<i64: 16, 7>}, {pipeline_mode = #tpu.pipeline_mode<synchronous>, transform_indices = @transform_2, window_bounds = array<i64: 16, 1>}, {pipeline_mode = #tpu.pipeline_mode<synchronous>, transform_indices = @transform_3, window_bounds = array<i64: 32, 16>}, {pipeline_mode = #tpu.pipeline_mode<synchronous>, transform_indices = @transform_4, window_bounds = array<i64: 32, 1>}, {transform_indices = @transform_5, window_bounds = array<i64: 1, 32, 16>}]} {
    %c0 = arith.constant 0 : index
    %c0_0 = arith.constant 0 : index
    %c0_1 = arith.constant 0 : index
    %c0_2 = arith.constant 0 : index
    %0 = vector.load %arg2[%c0, %c0_0, %c0_1, %c0_2] : memref<1x8x7x16xbf16, #tpu.memory_space<vmem>>, vector<1x1x7x16xbf16>
    %1 = vector.shape_cast %0 : vector<1x1x7x16xbf16> to vector<7x16xbf16>
    %c0_3 = arith.constant 0 : index
    %c0_4 = arith.constant 0 : index
    %2 = vector.load %arg3[%c0_3, %c0_4] : memref<16x7xbf16, #tpu.memory_space<vmem>>, vector<16x7xbf16>
    %c0_5 = arith.constant 0 : index
    %c0_6 = arith.constant 0 : index
    %3 = vector.load %arg4[%c0_5, %c0_6] : memref<16x1xf32, #tpu.memory_space<vmem>>, vector<16x1xf32>
    %cst = arith.constant dense<0.000000e+00> : vector<16x16xf32>
    %4 = tpu.matmul %2, %1, %cst {dimension_numbers = #tpu.dot_dimension_numbers<[1], [0], [0], [1], [0, 0, 1, 1], [], []>} : vector<16x7xbf16>, vector<7x16xbf16>, vector<16x16xf32> -> vector<16x16xf32>
    %5 = vector.broadcast %3 : vector<16x1xf32> to vector<16x16xf32>
    %6 = arith.addf %4, %5 : vector<16x16xf32>
    %cst_7 = arith.constant 0.000000e+00 : f32
    %7 = vector.broadcast %cst_7 : f32 to vector<16x16xf32>
    %8 = arith.maximumf %6, %7 : vector<16x16xf32>
    %9 = arith.truncf %8 : vector<16x16xf32> to vector<16x16xbf16>
    %c0_8 = arith.constant 0 : index
    %c0_9 = arith.constant 0 : index
    %10 = vector.load %arg5[%c0_8, %c0_9] : memref<32x16xbf16, #tpu.memory_space<vmem>>, vector<32x16xbf16>
    %c0_10 = arith.constant 0 : index
    %c0_11 = arith.constant 0 : index
    %11 = vector.load %arg6[%c0_10, %c0_11] : memref<32x1xf32, #tpu.memory_space<vmem>>, vector<32x1xf32>
    %cst_12 = arith.constant dense<0.000000e+00> : vector<32x16xf32>
    %12 = tpu.matmul %10, %9, %cst_12 {dimension_numbers = #tpu.dot_dimension_numbers<[1], [0], [0], [1], [0, 0, 1, 1], [], []>} : vector<32x16xbf16>, vector<16x16xbf16>, vector<32x16xf32> -> vector<32x16xf32>
    %13 = vector.broadcast %11 : vector<32x1xf32> to vector<32x16xf32>
    %14 = arith.addf %12, %13 : vector<32x16xf32>
    %cst_13 = arith.constant 0.000000e+00 : f32
    %15 = vector.broadcast %cst_13 : f32 to vector<32x16xf32>
    %16 = arith.maximumf %14, %15 : vector<32x16xf32>
    %c0_14 = arith.constant 0 : index
    %c1 = arith.constant 1 : index
    %c0_15 = arith.constant 0 : index
    %c0_16 = arith.constant 0 : index
    %17 = vector.load %arg2[%c0_14, %c1, %c0_15, %c0_16] : memref<1x8x7x16xbf16, #tpu.memory_space<vmem>>, vector<1x1x7x16xbf16>
    %18 = vector.shape_cast %17 : vector<1x1x7x16xbf16> to vector<7x16xbf16>
    %c0_17 = arith.constant 0 : index
    %c0_18 = arith.constant 0 : index
    %19 = vector.load %arg3[%c0_17, %c0_18] : memref<16x7xbf16, #tpu.memory_space<vmem>>, vector<16x7xbf16>
    %c0_19 = arith.constant 0 : index
    %c0_20 = arith.constant 0 : index
    %20 = vector.load %arg4[%c0_19, %c0_20] : memref<16x1xf32, #tpu.memory_space<vmem>>, vector<16x1xf32>
    %cst_21 = arith.constant dense<0.000000e+00> : vector<16x16xf32>
    %21 = tpu.matmul %19, %18, %cst_21 {dimension_numbers = #tpu.dot_dimension_numbers<[1], [0], [0], [1], [0, 0, 1, 1], [], []>} : vector<16x7xbf16>, vector<7x16xbf16>, vector<16x16xf32> -> vector<16x16xf32>
    %22 = vector.broadcast %20 : vector<16x1xf32> to vector<16x16xf32>
    %23 = arith.addf %21, %22 : vector<16x16xf32>
    %cst_22 = arith.constant 0.000000e+00 : f32
    %24 = vector.broadcast %cst_22 : f32 to vector<16x16xf32>
    %25 = arith.maximumf %23, %24 : vector<16x16xf32>
    %26 = arith.truncf %25 : vector<16x16xf32> to vector<16x16xbf16>
    %c0_23 = arith.constant 0 : index
    %c0_24 = arith.constant 0 : index
    %27 = vector.load %arg5[%c0_23, %c0_24] : memref<32x16xbf16, #tpu.memory_space<vmem>>, vector<32x16xbf16>
    %c0_25 = arith.constant 0 : index
    %c0_26 = arith.constant 0 : index
    %28 = vector.load %arg6[%c0_25, %c0_26] : memref<32x1xf32, #tpu.memory_space<vmem>>, vector<32x1xf32>
    %cst_27 = arith.constant dense<0.000000e+00> : vector<32x16xf32>
    %29 = tpu.matmul %27, %26, %cst_27 {dimension_numbers = #tpu.dot_dimension_numbers<[1], [0], [0], [1], [0, 0, 1, 1], [], []>} : vector<32x16xbf16>, vector<16x16xbf16>, vector<32x16xf32> -> vector<32x16xf32>
    %30 = vector.broadcast %28 : vector<32x1xf32> to vector<32x16xf32>
    %31 = arith.addf %29, %30 : vector<32x16xf32>
    %cst_28 = arith.constant 0.000000e+00 : f32
    %32 = vector.broadcast %cst_28 : f32 to vector<32x16xf32>
    %33 = arith.maximumf %31, %32 : vector<32x16xf32>
    %34 = arith.maximumf %16, %33 : vector<32x16xf32>
    %c0_29 = arith.constant 0 : index
    %c2 = arith.constant 2 : index
    %c0_30 = arith.constant 0 : index
    %c0_31 = arith.constant 0 : index
    %35 = vector.load %arg2[%c0_29, %c2, %c0_30, %c0_31] : memref<1x8x7x16xbf16, #tpu.memory_space<vmem>>, vector<1x1x7x16xbf16>
    %36 = vector.shape_cast %35 : vector<1x1x7x16xbf16> to vector<7x16xbf16>
    %c0_32 = arith.constant 0 : index
    %c0_33 = arith.constant 0 : index
    %37 = vector.load %arg3[%c0_32, %c0_33] : memref<16x7xbf16, #tpu.memory_space<vmem>>, vector<16x7xbf16>
    %c0_34 = arith.constant 0 : index
    %c0_35 = arith.constant 0 : index
    %38 = vector.load %arg4[%c0_34, %c0_35] : memref<16x1xf32, #tpu.memory_space<vmem>>, vector<16x1xf32>
    %cst_36 = arith.constant dense<0.000000e+00> : vector<16x16xf32>
    %39 = tpu.matmul %37, %36, %cst_36 {dimension_numbers = #tpu.dot_dimension_numbers<[1], [0], [0], [1], [0, 0, 1, 1], [], []>} : vector<16x7xbf16>, vector<7x16xbf16>, vector<16x16xf32> -> vector<16x16xf32>
    %40 = vector.broadcast %38 : vector<16x1xf32> to vector<16x16xf32>
    %41 = arith.addf %39, %40 : vector<16x16xf32>
    %cst_37 = arith.constant 0.000000e+00 : f32
    %42 = vector.broadcast %cst_37 : f32 to vector<16x16xf32>
    %43 = arith.maximumf %41, %42 : vector<16x16xf32>
    %44 = arith.truncf %43 : vector<16x16xf32> to vector<16x16xbf16>
    %c0_38 = arith.constant 0 : index
    %c0_39 = arith.constant 0 : index
    %45 = vector.load %arg5[%c0_38, %c0_39] : memref<32x16xbf16, #tpu.memory_space<vmem>>, vector<32x16xbf16>
    %c0_40 = arith.constant 0 : index
    %c0_41 = arith.constant 0 : index
    %46 = vector.load %arg6[%c0_40, %c0_41] : memref<32x1xf32, #tpu.memory_space<vmem>>, vector<32x1xf32>
    %cst_42 = arith.constant dense<0.000000e+00> : vector<32x16xf32>
    %47 = tpu.matmul %45, %44, %cst_42 {dimension_numbers = #tpu.dot_dimension_numbers<[1], [0], [0], [1], [0, 0, 1, 1], [], []>} : vector<32x16xbf16>, vector<16x16xbf16>, vector<32x16xf32> -> vector<32x16xf32>
    %48 = vector.broadcast %46 : vector<32x1xf32> to vector<32x16xf32>
    %49 = arith.addf %47, %48 : vector<32x16xf32>
    %cst_43 = arith.constant 0.000000e+00 : f32
    %50 = vector.broadcast %cst_43 : f32 to vector<32x16xf32>
    %51 = arith.maximumf %49, %50 : vector<32x16xf32>
    %52 = arith.maximumf %34, %51 : vector<32x16xf32>
    %c0_44 = arith.constant 0 : index
    %c3 = arith.constant 3 : index
    %c0_45 = arith.constant 0 : index
    %c0_46 = arith.constant 0 : index
    %53 = vector.load %arg2[%c0_44, %c3, %c0_45, %c0_46] : memref<1x8x7x16xbf16, #tpu.memory_space<vmem>>, vector<1x1x7x16xbf16>
    %54 = vector.shape_cast %53 : vector<1x1x7x16xbf16> to vector<7x16xbf16>
    %c0_47 = arith.constant 0 : index
    %c0_48 = arith.constant 0 : index
    %55 = vector.load %arg3[%c0_47, %c0_48] : memref<16x7xbf16, #tpu.memory_space<vmem>>, vector<16x7xbf16>
    %c0_49 = arith.constant 0 : index
    %c0_50 = arith.constant 0 : index
    %56 = vector.load %arg4[%c0_49, %c0_50] : memref<16x1xf32, #tpu.memory_space<vmem>>, vector<16x1xf32>
    %cst_51 = arith.constant dense<0.000000e+00> : vector<16x16xf32>
    %57 = tpu.matmul %55, %54, %cst_51 {dimension_numbers = #tpu.dot_dimension_numbers<[1], [0], [0], [1], [0, 0, 1, 1], [], []>} : vector<16x7xbf16>, vector<7x16xbf16>, vector<16x16xf32> -> vector<16x16xf32>
    %58 = vector.broadcast %56 : vector<16x1xf32> to vector<16x16xf32>
    %59 = arith.addf %57, %58 : vector<16x16xf32>
    %cst_52 = arith.constant 0.000000e+00 : f32
    %60 = vector.broadcast %cst_52 : f32 to vector<16x16xf32>
    %61 = arith.maximumf %59, %60 : vector<16x16xf32>
    %62 = arith.truncf %61 : vector<16x16xf32> to vector<16x16xbf16>
    %c0_53 = arith.constant 0 : index
    %c0_54 = arith.constant 0 : index
    %63 = vector.load %arg5[%c0_53, %c0_54] : memref<32x16xbf16, #tpu.memory_space<vmem>>, vector<32x16xbf16>
    %c0_55 = arith.constant 0 : index
    %c0_56 = arith.constant 0 : index
    %64 = vector.load %arg6[%c0_55, %c0_56] : memref<32x1xf32, #tpu.memory_space<vmem>>, vector<32x1xf32>
    %cst_57 = arith.constant dense<0.000000e+00> : vector<32x16xf32>
    %65 = tpu.matmul %63, %62, %cst_57 {dimension_numbers = #tpu.dot_dimension_numbers<[1], [0], [0], [1], [0, 0, 1, 1], [], []>} : vector<32x16xbf16>, vector<16x16xbf16>, vector<32x16xf32> -> vector<32x16xf32>
    %66 = vector.broadcast %64 : vector<32x1xf32> to vector<32x16xf32>
    %67 = arith.addf %65, %66 : vector<32x16xf32>
    %cst_58 = arith.constant 0.000000e+00 : f32
    %68 = vector.broadcast %cst_58 : f32 to vector<32x16xf32>
    %69 = arith.maximumf %67, %68 : vector<32x16xf32>
    %70 = arith.maximumf %52, %69 : vector<32x16xf32>
    %c0_59 = arith.constant 0 : index
    %c4 = arith.constant 4 : index
    %c0_60 = arith.constant 0 : index
    %c0_61 = arith.constant 0 : index
    %71 = vector.load %arg2[%c0_59, %c4, %c0_60, %c0_61] : memref<1x8x7x16xbf16, #tpu.memory_space<vmem>>, vector<1x1x7x16xbf16>
    %72 = vector.shape_cast %71 : vector<1x1x7x16xbf16> to vector<7x16xbf16>
    %c0_62 = arith.constant 0 : index
    %c0_63 = arith.constant 0 : index
    %73 = vector.load %arg3[%c0_62, %c0_63] : memref<16x7xbf16, #tpu.memory_space<vmem>>, vector<16x7xbf16>
    %c0_64 = arith.constant 0 : index
    %c0_65 = arith.constant 0 : index
    %74 = vector.load %arg4[%c0_64, %c0_65] : memref<16x1xf32, #tpu.memory_space<vmem>>, vector<16x1xf32>
    %cst_66 = arith.constant dense<0.000000e+00> : vector<16x16xf32>
    %75 = tpu.matmul %73, %72, %cst_66 {dimension_numbers = #tpu.dot_dimension_numbers<[1], [0], [0], [1], [0, 0, 1, 1], [], []>} : vector<16x7xbf16>, vector<7x16xbf16>, vector<16x16xf32> -> vector<16x16xf32>
    %76 = vector.broadcast %74 : vector<16x1xf32> to vector<16x16xf32>
    %77 = arith.addf %75, %76 : vector<16x16xf32>
    %cst_67 = arith.constant 0.000000e+00 : f32
    %78 = vector.broadcast %cst_67 : f32 to vector<16x16xf32>
    %79 = arith.maximumf %77, %78 : vector<16x16xf32>
    %80 = arith.truncf %79 : vector<16x16xf32> to vector<16x16xbf16>
    %c0_68 = arith.constant 0 : index
    %c0_69 = arith.constant 0 : index
    %81 = vector.load %arg5[%c0_68, %c0_69] : memref<32x16xbf16, #tpu.memory_space<vmem>>, vector<32x16xbf16>
    %c0_70 = arith.constant 0 : index
    %c0_71 = arith.constant 0 : index
    %82 = vector.load %arg6[%c0_70, %c0_71] : memref<32x1xf32, #tpu.memory_space<vmem>>, vector<32x1xf32>
    %cst_72 = arith.constant dense<0.000000e+00> : vector<32x16xf32>
    %83 = tpu.matmul %81, %80, %cst_72 {dimension_numbers = #tpu.dot_dimension_numbers<[1], [0], [0], [1], [0, 0, 1, 1], [], []>} : vector<32x16xbf16>, vector<16x16xbf16>, vector<32x16xf32> -> vector<32x16xf32>
    %84 = vector.broadcast %82 : vector<32x1xf32> to vector<32x16xf32>
    %85 = arith.addf %83, %84 : vector<32x16xf32>
    %cst_73 = arith.constant 0.000000e+00 : f32
    %86 = vector.broadcast %cst_73 : f32 to vector<32x16xf32>
    %87 = arith.maximumf %85, %86 : vector<32x16xf32>
    %88 = arith.maximumf %70, %87 : vector<32x16xf32>
    %c0_74 = arith.constant 0 : index
    %c5 = arith.constant 5 : index
    %c0_75 = arith.constant 0 : index
    %c0_76 = arith.constant 0 : index
    %89 = vector.load %arg2[%c0_74, %c5, %c0_75, %c0_76] : memref<1x8x7x16xbf16, #tpu.memory_space<vmem>>, vector<1x1x7x16xbf16>
    %90 = vector.shape_cast %89 : vector<1x1x7x16xbf16> to vector<7x16xbf16>
    %c0_77 = arith.constant 0 : index
    %c0_78 = arith.constant 0 : index
    %91 = vector.load %arg3[%c0_77, %c0_78] : memref<16x7xbf16, #tpu.memory_space<vmem>>, vector<16x7xbf16>
    %c0_79 = arith.constant 0 : index
    %c0_80 = arith.constant 0 : index
    %92 = vector.load %arg4[%c0_79, %c0_80] : memref<16x1xf32, #tpu.memory_space<vmem>>, vector<16x1xf32>
    %cst_81 = arith.constant dense<0.000000e+00> : vector<16x16xf32>
    %93 = tpu.matmul %91, %90, %cst_81 {dimension_numbers = #tpu.dot_dimension_numbers<[1], [0], [0], [1], [0, 0, 1, 1], [], []>} : vector<16x7xbf16>, vector<7x16xbf16>, vector<16x16xf32> -> vector<16x16xf32>
    %94 = vector.broadcast %92 : vector<16x1xf32> to vector<16x16xf32>
    %95 = arith.addf %93, %94 : vector<16x16xf32>
    %cst_82 = arith.constant 0.000000e+00 : f32
    %96 = vector.broadcast %cst_82 : f32 to vector<16x16xf32>
    %97 = arith.maximumf %95, %96 : vector<16x16xf32>
    %98 = arith.truncf %97 : vector<16x16xf32> to vector<16x16xbf16>
    %c0_83 = arith.constant 0 : index
    %c0_84 = arith.constant 0 : index
    %99 = vector.load %arg5[%c0_83, %c0_84] : memref<32x16xbf16, #tpu.memory_space<vmem>>, vector<32x16xbf16>
    %c0_85 = arith.constant 0 : index
    %c0_86 = arith.constant 0 : index
    %100 = vector.load %arg6[%c0_85, %c0_86] : memref<32x1xf32, #tpu.memory_space<vmem>>, vector<32x1xf32>
    %cst_87 = arith.constant dense<0.000000e+00> : vector<32x16xf32>
    %101 = tpu.matmul %99, %98, %cst_87 {dimension_numbers = #tpu.dot_dimension_numbers<[1], [0], [0], [1], [0, 0, 1, 1], [], []>} : vector<32x16xbf16>, vector<16x16xbf16>, vector<32x16xf32> -> vector<32x16xf32>
    %102 = vector.broadcast %100 : vector<32x1xf32> to vector<32x16xf32>
    %103 = arith.addf %101, %102 : vector<32x16xf32>
    %cst_88 = arith.constant 0.000000e+00 : f32
    %104 = vector.broadcast %cst_88 : f32 to vector<32x16xf32>
    %105 = arith.maximumf %103, %104 : vector<32x16xf32>
    %106 = arith.maximumf %88, %105 : vector<32x16xf32>
    %c0_89 = arith.constant 0 : index
    %c6 = arith.constant 6 : index
    %c0_90 = arith.constant 0 : index
    %c0_91 = arith.constant 0 : index
    %107 = vector.load %arg2[%c0_89, %c6, %c0_90, %c0_91] : memref<1x8x7x16xbf16, #tpu.memory_space<vmem>>, vector<1x1x7x16xbf16>
    %108 = vector.shape_cast %107 : vector<1x1x7x16xbf16> to vector<7x16xbf16>
    %c0_92 = arith.constant 0 : index
    %c0_93 = arith.constant 0 : index
    %109 = vector.load %arg3[%c0_92, %c0_93] : memref<16x7xbf16, #tpu.memory_space<vmem>>, vector<16x7xbf16>
    %c0_94 = arith.constant 0 : index
    %c0_95 = arith.constant 0 : index
    %110 = vector.load %arg4[%c0_94, %c0_95] : memref<16x1xf32, #tpu.memory_space<vmem>>, vector<16x1xf32>
    %cst_96 = arith.constant dense<0.000000e+00> : vector<16x16xf32>
    %111 = tpu.matmul %109, %108, %cst_96 {dimension_numbers = #tpu.dot_dimension_numbers<[1], [0], [0], [1], [0, 0, 1, 1], [], []>} : vector<16x7xbf16>, vector<7x16xbf16>, vector<16x16xf32> -> vector<16x16xf32>
    %112 = vector.broadcast %110 : vector<16x1xf32> to vector<16x16xf32>
    %113 = arith.addf %111, %112 : vector<16x16xf32>
    %cst_97 = arith.constant 0.000000e+00 : f32
    %114 = vector.broadcast %cst_97 : f32 to vector<16x16xf32>
    %115 = arith.maximumf %113, %114 : vector<16x16xf32>
    %116 = arith.truncf %115 : vector<16x16xf32> to vector<16x16xbf16>
    %c0_98 = arith.constant 0 : index
    %c0_99 = arith.constant 0 : index
    %117 = vector.load %arg5[%c0_98, %c0_99] : memref<32x16xbf16, #tpu.memory_space<vmem>>, vector<32x16xbf16>
    %c0_100 = arith.constant 0 : index
    %c0_101 = arith.constant 0 : index
    %118 = vector.load %arg6[%c0_100, %c0_101] : memref<32x1xf32, #tpu.memory_space<vmem>>, vector<32x1xf32>
    %cst_102 = arith.constant dense<0.000000e+00> : vector<32x16xf32>
    %119 = tpu.matmul %117, %116, %cst_102 {dimension_numbers = #tpu.dot_dimension_numbers<[1], [0], [0], [1], [0, 0, 1, 1], [], []>} : vector<32x16xbf16>, vector<16x16xbf16>, vector<32x16xf32> -> vector<32x16xf32>
    %120 = vector.broadcast %118 : vector<32x1xf32> to vector<32x16xf32>
    %121 = arith.addf %119, %120 : vector<32x16xf32>
    %cst_103 = arith.constant 0.000000e+00 : f32
    %122 = vector.broadcast %cst_103 : f32 to vector<32x16xf32>
    %123 = arith.maximumf %121, %122 : vector<32x16xf32>
    %124 = arith.maximumf %106, %123 : vector<32x16xf32>
    %c0_104 = arith.constant 0 : index
    %c7 = arith.constant 7 : index
    %c0_105 = arith.constant 0 : index
    %c0_106 = arith.constant 0 : index
    %125 = vector.load %arg2[%c0_104, %c7, %c0_105, %c0_106] : memref<1x8x7x16xbf16, #tpu.memory_space<vmem>>, vector<1x1x7x16xbf16>
    %126 = vector.shape_cast %125 : vector<1x1x7x16xbf16> to vector<7x16xbf16>
    %c0_107 = arith.constant 0 : index
    %c0_108 = arith.constant 0 : index
    %127 = vector.load %arg3[%c0_107, %c0_108] : memref<16x7xbf16, #tpu.memory_space<vmem>>, vector<16x7xbf16>
    %c0_109 = arith.constant 0 : index
    %c0_110 = arith.constant 0 : index
    %128 = vector.load %arg4[%c0_109, %c0_110] : memref<16x1xf32, #tpu.memory_space<vmem>>, vector<16x1xf32>
    %cst_111 = arith.constant dense<0.000000e+00> : vector<16x16xf32>
    %129 = tpu.matmul %127, %126, %cst_111 {dimension_numbers = #tpu.dot_dimension_numbers<[1], [0], [0], [1], [0, 0, 1, 1], [], []>} : vector<16x7xbf16>, vector<7x16xbf16>, vector<16x16xf32> -> vector<16x16xf32>
    %130 = vector.broadcast %128 : vector<16x1xf32> to vector<16x16xf32>
    %131 = arith.addf %129, %130 : vector<16x16xf32>
    %cst_112 = arith.constant 0.000000e+00 : f32
    %132 = vector.broadcast %cst_112 : f32 to vector<16x16xf32>
    %133 = arith.maximumf %131, %132 : vector<16x16xf32>
    %134 = arith.truncf %133 : vector<16x16xf32> to vector<16x16xbf16>
    %c0_113 = arith.constant 0 : index
    %c0_114 = arith.constant 0 : index
    %135 = vector.load %arg5[%c0_113, %c0_114] : memref<32x16xbf16, #tpu.memory_space<vmem>>, vector<32x16xbf16>
    %c0_115 = arith.constant 0 : index
    %c0_116 = arith.constant 0 : index
    %136 = vector.load %arg6[%c0_115, %c0_116] : memref<32x1xf32, #tpu.memory_space<vmem>>, vector<32x1xf32>
    %cst_117 = arith.constant dense<0.000000e+00> : vector<32x16xf32>
    %137 = tpu.matmul %135, %134, %cst_117 {dimension_numbers = #tpu.dot_dimension_numbers<[1], [0], [0], [1], [0, 0, 1, 1], [], []>} : vector<32x16xbf16>, vector<16x16xbf16>, vector<32x16xf32> -> vector<32x16xf32>
    %138 = vector.broadcast %136 : vector<32x1xf32> to vector<32x16xf32>
    %139 = arith.addf %137, %138 : vector<32x16xf32>
    %cst_118 = arith.constant 0.000000e+00 : f32
    %140 = vector.broadcast %cst_118 : f32 to vector<32x16xf32>
    %141 = arith.maximumf %139, %140 : vector<32x16xf32>
    %142 = arith.maximumf %124, %141 : vector<32x16xf32>
    %c0_119 = arith.constant 0 : index
    %c0_120 = arith.constant 0 : index
    %c0_121 = arith.constant 0 : index
    %143 = vector.load %arg7[%c0_119, %c0_120, %c0_121] : memref<1x32x16xf32, #tpu.memory_space<vmem>>, vector<1x32x16xf32>
    %144 = vector.shape_cast %143 : vector<1x32x16xf32> to vector<32x16xf32>
    %145 = vector.shape_cast %142 : vector<32x16xf32> to vector<1x32x16xf32>
    tpu.vector_store %arg7[%c0_119, %c0_120, %c0_121], %145 {strides = array<i32>} : memref<1x32x16xf32, #tpu.memory_space<vmem>>, vector<1x32x16xf32>,
    return
  }
  func.func @transform_0(%arg0: i32, %arg1: i32) -> (i32, i32, i32, i32) {
    %c0_i32 = arith.constant 0 : i32
    %c0_i32_0 = arith.constant 0 : i32
    %c0_i32_1 = arith.constant 0 : i32
    return %arg0, %c0_i32, %c0_i32_0, %arg1 : i32, i32, i32, i32
  }
  func.func @transform_1(%arg0: i32, %arg1: i32) -> (i32, i32) {
    %c0_i32 = arith.constant 0 : i32
    %c0_i32_0 = arith.constant 0 : i32
    %c0_i32_1 = arith.constant 0 : i32
    return %c0_i32, %c0_i32_0 : i32, i32
  }
  func.func @transform_2(%arg0: i32, %arg1: i32) -> (i32, i32) {
    %c0_i32 = arith.constant 0 : i32
    %c0_i32_0 = arith.constant 0 : i32
    %c0_i32_1 = arith.constant 0 : i32
    return %c0_i32, %c0_i32_0 : i32, i32
  }
  func.func @transform_3(%arg0: i32, %arg1: i32) -> (i32, i32) {
    %c0_i32 = arith.constant 0 : i32
    %c0_i32_0 = arith.constant 0 : i32
    %c0_i32_1 = arith.constant 0 : i32
    return %c0_i32, %c0_i32_0 : i32, i32
  }
  func.func @transform_4(%arg0: i32, %arg1: i32) -> (i32, i32) {
    %c0_i32 = arith.constant 0 : i32
    %c0_i32_0 = arith.constant 0 : i32
    %c0_i32_1 = arith.constant 0 : i32
    return %c0_i32, %c0_i32_0 : i32, i32
  }
  func.func @transform_5(%arg0: i32, %arg1: i32) -> (i32, i32, i32) {
    %c0_i32 = arith.constant 0 : i32
    %c0_i32_0 = arith.constant 0 : i32
    return %arg0, %c0_i32, %arg1 : i32, i32, i32
  }
}

</mosaic_0001>

<llo_original>
// kernel: tpu_custom_call.1
$region0: #{tpu_custom_call.1}
  #allocation0 [shape = 'u32[]', space=smem, size = 0x4, offset = 0x4, fixed_abs, tag = 'smem constant byte address 0x4 - core index']
  #allocation1 [shape = 'u32[144,128]{1,0:T(1,128)}', space=vmem, size = 0x12000, scoped, tag = 'internal scratch']
  %s0 = inlined_call_operand.vmem [shape: bf16[2,8,7,16], index: 0, kind: input, shape index: {}]
  %s1 = inlined_call_operand.vmem [shape: bf16[16,7], index: 1, kind: input, shape index: {}]
  %s2 = inlined_call_operand.vmem [shape: f32[16,1], index: 2, kind: input, shape index: {}]
  %s3 = inlined_call_operand.vmem [shape: bf16[32,16], index: 3, kind: input, shape index: {}]
  %s4 = inlined_call_operand.vmem [shape: f32[32,1], index: 4, kind: input, shape index: {}]
  %s5 = inlined_call_operand.vmem [shape: f32[2,32,16], index: 5, kind: output, shape index: {}]
  %s6 = sld [smem:[#allocation0]]
  $region53: #{tpu_custom_call.1} parent=0
    _
  %s8 = ssub.s32 1, %s6
  %s9 = scalar_select 0, %s8, %s6
  loop: start=0, step=1, limit=4
  $region2: #{tpu_custom_call.1} parent=0 // loop_pre_header
    _
  $region3: #{tpu_custom_call.1} parent=0 // loop_header
    %s11 = sphi 0, %s15
    %p12 = scmp.ge.s32.totalorder %s11, 4
    %s18 = sphi 0, %s30
    %s19 = sphi 0, %s26
    %s20 = sphi 0, %s18
    %s21 = sphi 0, %s19
    %s22 = sphi 0, %s20
    %s23 = sphi 0, %s21
    %s35 = sphi 0, %s37
    %s38 = sphi 0, %s35
    %s39 = sphi 0, %s38
    %s55 = sphi 0, %s39
    %s59 = sphi 0, %s59
    %s61 = sphi 0, %s59
    %s62 = sphi 0, %s61
    %s76 = sphi 0, %s62
    %s80 = sphi 0, %s80
    %s82 = sphi 0, %s80
    %s83 = sphi 0, %s82
    %s97 = sphi 0, %s83
    %s101 = sphi 0, %s101
    %s103 = sphi 0, %s101
    %s104 = sphi 0, %s103
    %s118 = sphi 0, %s104
    %s122 = sphi 0, %s122
    %s124 = sphi 0, %s122
    %s125 = sphi 0, %s124
    %s139 = sphi 0, %s125
    %s147 = sphi 0, %s149
    %s150 = sphi 0, %s147
    %s151 = sphi 0, %s150
    %s167 = sphi 0, %s151
  $region4: #{tpu_custom_call.1} parent=0 // loop_header_branch
    %14 = sbr.rel (%p12) target = $region8
  $region5: #{tpu_custom_call.1} parent=0 // loop_body
    %s16 = ssub.s32 %s11, 1
    %s17 = ssub.s32 %s11, 2
    %s24 = sadd.s32 1, %s19
    %p25 = scmp.ge.s32.totalorder %s24, 1
    %s26 = scalar_select %p25, 0, %s24
    %s27 = sadd.s32 1, %s18
    %s28 = scalar_select %p25, %s27, %s18
    %p29 = scmp.ge.s32.totalorder %s28, 2
    %s30 = scalar_select %p29, 0, %s28
    %s31 = ssub.s32 %s18, %s30
    %s32 = ssub.s32 %s19, %s26
    %s33 = sor.u32 %s31, %s32
    %p34 = scmp.eq.s32.totalorder %s33, 0
    %s36 = sadd.s32 %s35, 1
    %s37 = scalar_select %p34, %s35, %s36
    %p40 = pneg %p34
    %p41 = scmp.eq.s32.totalorder %s11, 1
    %p42 = por %p40, %p41
    %p43 = scmp.ne.s32.totalorder %s35, %s38
    %p44 = scmp.eq.s32.totalorder %s11, 0
    %p45 = por %p43, %p44
    %p46 = scmp.ne.s32.totalorder %s35, %s38
    %p47 = scmp.eq.s32.totalorder %s16, 1
    %p48 = por %p46, %p47
    %p49 = scmp.ne.s32.totalorder %s38, %s39
    %p50 = scmp.eq.s32.totalorder %s16, 0
    %p51 = por %p49, %p50
    %p52 = scmp.ne.s32.totalorder %s38, %s39
    %p53 = scmp.eq.s32.totalorder %s17, 1
    %p54 = por %p52, %p53
    %p56 = scmp.ne.s32.totalorder %s39, %s55
    %p57 = scmp.eq.s32.totalorder %s17, 0
    %p58 = por %p56, %p57
    %s60 = sadd.s32 %s59, 1
    %p63 = scmp.eq.s32.totalorder %s11, 1
    %p64 = scmp.ne.s32.totalorder %s59, %s61
    %p65 = scmp.eq.s32.totalorder %s11, 0
    %p66 = por %p64, %p65
    %p67 = scmp.ne.s32.totalorder %s59, %s61
    %p68 = scmp.eq.s32.totalorder %s16, 1
    %p69 = por %p67, %p68
    %p70 = scmp.ne.s32.totalorder %s61, %s62
    %p71 = scmp.eq.s32.totalorder %s16, 0
    %p72 = por %p70, %p71
    %p73 = scmp.ne.s32.totalorder %s61, %s62
    %p74 = scmp.eq.s32.totalorder %s17, 1
    %p75 = por %p73, %p74
    %p77 = scmp.ne.s32.totalorder %s62, %s76
    %p78 = scmp.eq.s32.totalorder %s17, 0
    %p79 = por %p77, %p78
    %s81 = sadd.s32 %s80, 1
    %p84 = scmp.eq.s32.totalorder %s11, 1
    %p85 = scmp.ne.s32.totalorder %s80, %s82
    %p86 = scmp.eq.s32.totalorder %s11, 0
    %p87 = por %p85, %p86
    %p88 = scmp.ne.s32.totalorder %s80, %s82
    %p89 = scmp.eq.s32.totalorder %s16, 1
    %p90 = por %p88, %p89
    %p91 = scmp.ne.s32.totalorder %s82, %s83
    %p92 = scmp.eq.s32.totalorder %s16, 0
    %p93 = por %p91, %p92
    %p94 = scmp.ne.s32.totalorder %s82, %s83
    %p95 = scmp.eq.s32.totalorder %s17, 1
    %p96 = por %p94, %p95
    %p98 = scmp.ne.s32.totalorder %s83, %s97
    %p99 = scmp.eq.s32.totalorder %s17, 0
    %p100 = por %p98, %p99
    %s102 = sadd.s32 %s101, 1
    %p105 = scmp.eq.s32.totalorder %s11, 1
    %p106 = scmp.ne.s32.totalorder %s101, %s103
    %p107 = scmp.eq.s32.totalorder %s11, 0
    %p108 = por %p106, %p107
    %p109 = scmp.ne.s32.totalorder %s101, %s103
    %p110 = scmp.eq.s32.totalorder %s16, 1
    %p111 = por %p109, %p110
    %p112 = scmp.ne.s32.totalorder %s103, %s104
    %p113 = scmp.eq.s32.totalorder %s16, 0
    %p114 = por %p112, %p113
    %p115 = scmp.ne.s32.totalorder %s103, %s104
    %p116 = scmp.eq.s32.totalorder %s17, 1
    %p117 = por %p115, %p116
    %p119 = scmp.ne.s32.totalorder %s104, %s118
    %p120 = scmp.eq.s32.totalorder %s17, 0
    %p121 = por %p119, %p120
    %s123 = sadd.s32 %s122, 1
    %p126 = scmp.eq.s32.totalorder %s11, 1
    %p127 = scmp.ne.s32.totalorder %s122, %s124
    %p128 = scmp.eq.s32.totalorder %s11, 0
    %p129 = por %p127, %p128
    %p130 = scmp.ne.s32.totalorder %s122, %s124
    %p131 = scmp.eq.s32.totalorder %s16, 1
    %p132 = por %p130, %p131
    %p133 = scmp.ne.s32.totalorder %s124, %s125
    %p134 = scmp.eq.s32.totalorder %s16, 0
    %p135 = por %p133, %p134
    %p136 = scmp.ne.s32.totalorder %s124, %s125
    %p137 = scmp.eq.s32.totalorder %s17, 1
    %p138 = por %p136, %p137
    %p140 = scmp.ne.s32.totalorder %s125, %s139
    %p141 = scmp.eq.s32.totalorder %s17, 0
    %p142 = por %p140, %p141
    %s143 = ssub.s32 %s18, %s30
    %s144 = ssub.s32 %s19, %s26
    %s145 = sor.u32 %s143, %s144
    %p146 = scmp.eq.s32.totalorder %s145, 0
    %s148 = sadd.s32 %s147, 1
    %s149 = scalar_select %p146, %s147, %s148
    %p152 = pneg %p146
    %p153 = scmp.eq.s32.totalorder %s11, 1
    %p154 = por %p152, %p153
    %p155 = scmp.ne.s32.totalorder %s147, %s150
    %p156 = scmp.eq.s32.totalorder %s11, 0
    %p157 = por %p155, %p156
    %p158 = scmp.ne.s32.totalorder %s147, %s150
    %p159 = scmp.eq.s32.totalorder %s16, 1
    %p160 = por %p158, %p159
    %p161 = scmp.ne.s32.totalorder %s150, %s151
    %p162 = scmp.eq.s32.totalorder %s16, 0
    %p163 = por %p161, %p162
    %p164 = scmp.ne.s32.totalorder %s150, %s151
    %p165 = scmp.eq.s32.totalorder %s17, 1
    %p166 = por %p164, %p165
    %p168 = scmp.ne.s32.totalorder %s151, %s167
    %p169 = scmp.eq.s32.totalorder %s17, 0
    %p170 = por %p168, %p169
    %p171 = scmp.le.s32.totalorder 1, %s11
    %p172 = scmp.lt.s32.totalorder %s11, 3
    %p173 = pnand %p171, %p172
    %p174 = pneg %p173
    // Predicated region
    $region9: #{tpu_custom_call.1} parent=5 // pred_check
      _
    $region10: #{tpu_custom_call.1} parent=5 // pred_check_branch
      %176 = sbr.rel (%p173) target = $region12
    $region11: #{tpu_custom_call.1} parent=5 // pred_region
      %s177 = ssub.s32 %s11, 1
      // Predicated region
      $region13: #{tpu_custom_call.1} parent=11 // pred_check
        %p178 = pneg %p72
      $region14: #{tpu_custom_call.1} parent=11 // pred_check_branch
        %180 = sbr.rel (%p178) target = $region16
      $region15: #{tpu_custom_call.1} parent=11 // pred_region
        _
      $region16: #{tpu_custom_call.1} parent=11 // pred_fallthru
        _
      // Predicated region
      $region17: #{tpu_custom_call.1} parent=11 // pred_check
        %p181 = pneg %p93
      $region18: #{tpu_custom_call.1} parent=11 // pred_check_branch
        %183 = sbr.rel (%p181) target = $region20
      $region19: #{tpu_custom_call.1} parent=11 // pred_region
        _
      $region20: #{tpu_custom_call.1} parent=11 // pred_fallthru
        _
      // Predicated region
      $region21: #{tpu_custom_call.1} parent=11 // pred_check
        %p184 = pneg %p114
      $region22: #{tpu_custom_call.1} parent=11 // pred_check_branch
        %186 = sbr.rel (%p184) target = $region24
      $region23: #{tpu_custom_call.1} parent=11 // pred_region
        _
      $region24: #{tpu_custom_call.1} parent=11 // pred_fallthru
        _
      // Predicated region
      $region25: #{tpu_custom_call.1} parent=11 // pred_check
        %p187 = pneg %p135
      $region26: #{tpu_custom_call.1} parent=11 // pred_check_branch
        %189 = sbr.rel (%p187) target = $region28
      $region27: #{tpu_custom_call.1} parent=11 // pred_region
        _
      $region28: #{tpu_custom_call.1} parent=11 // pred_fallthru
        _
    $region12: #{tpu_custom_call.1} parent=5 // pred_fallthru
      _
    %p190 = scmp.lt.s32.totalorder %s11, 2
    // Predicated region
    $region29: #{tpu_custom_call.1} parent=5 // pred_check
      %p191 = pneg %p190
    $region30: #{tpu_custom_call.1} parent=5 // pred_check_branch
      %193 = sbr.rel (%p191) target = $region32
    $region31: #{tpu_custom_call.1} parent=5 // pred_region
      // Predicated region
      $region33: #{tpu_custom_call.1} parent=31 // pred_check
        %p194 = pneg %p45
      $region34: #{tpu_custom_call.1} parent=31 // pred_check_branch
        %196 = sbr.rel (%p194) target = $region36
      $region35: #{tpu_custom_call.1} parent=31 // pred_region
        %p197 = scmp.lt.s32.totalorder %s18, 1
        %s198 = scalar_select %p197, %s18, 1
        %p199 = scmp.lt.s32.totalorder %s19, 0
        %s200 = scalar_select %p199, %s19, 0
        %s201 = smul.addr %s198, 8
        %s202 = sadd.s32 %s200, %s201
        %s203 = smul.addr %s202, 4
        %s204 = scalar_lea.vmem %s0, %s203
      $region36: #{tpu_custom_call.1} parent=31 // pred_fallthru
        _
    $region32: #{tpu_custom_call.1} parent=5 // pred_fallthru
      _
    %p205 = scmp.le.s32.totalorder 1, %s11
    %p206 = scmp.lt.s32.totalorder %s11, 3
    %p207 = pnand %p205, %p206
    %p208 = pneg %p207
    // Predicated region
    $region37: #{tpu_custom_call.1} parent=5 // pred_check
      _
    $region38: #{tpu_custom_call.1} parent=5 // pred_check_branch
      %210 = sbr.rel (%p207) target = $region40
    $region39: #{tpu_custom_call.1} parent=5 // pred_region
      %s211 = ssub.s32 %s11, 1
      %p212 = scmp.lt.s32.totalorder %s20, 1
      %s213 = scalar_select %p212, %s20, 1
      %p214 = scmp.lt.s32.totalorder %s21, 0
      %s215 = scalar_select %p214, %s21, 0
      %s216 = smul.addr %s213, 8
      %s217 = sadd.s32 %s215, %s216
      %s218 = smul.addr %s217, 4
      %s219 = scalar_lea.vmem %s0, %s218
      %p220 = pneg %p51
      %p221 = pneg %p48
      %p222 = pneg %p72
      %p223 = pneg %p69
      %p224 = pneg %p93
      %p225 = pneg %p90
      %p226 = pneg %p114
      %p227 = pneg %p111
      %p228 = pneg %p135
      %p229 = pneg %p132
      %p230 = pneg %p163
      %p231 = pneg %p160
      %p232 = scmp.lt.s32.totalorder %s20, 1
      %s233 = scalar_select %p232, %s20, 1
      %p234 = scmp.lt.s32.totalorder %s21, 0
      %s235 = scalar_select %p234, %s21, 0
      %s236 = smul.addr %s233, 4
      %s237 = sadd.s32 %s235, %s236
      %s238 = smul.addr %s237, 8
      %s239 = scalar_lea.vmem %s5, %s238
      %p240 = scmp.lt.s32.totalorder %s20, 1
      %s241 = scalar_select %p240, %s20, 1
      %p242 = scmp.lt.s32.totalorder %s21, 0
      %s243 = scalar_select %p242, %s21, 0
      %s244 = smul.addr %s241, 8
      %s245 = sadd.s32 %s243, %s244
      %s246 = smul.addr %s245, 4
      %s247 = scalar_lea.vmem %s0, %s246
      %p248 = scmp.lt.s32.totalorder %s20, 1
      %s249 = scalar_select %p248, %s20, 1
      %p250 = scmp.lt.s32.totalorder %s21, 0
      %s251 = scalar_select %p250, %s21, 0
      %s252 = smul.addr %s249, 4
      %s253 = sadd.s32 %s251, %s252
      %s254 = smul.addr %s253, 8
      %s255 = scalar_lea.vmem %s5, %s254
      %v257 = vld [vmem:[%s247] sm:$0xf]
      %v258 = vld [vmem:[%s1] sm:$0xf]
      %v259 = vld [vmem:[%s1 + $0x4] sm:$0xf]
      %v260 = vld [vmem:[%s2] sm:$0xff]
      %v261 = vld [vmem:[%s2 + $0x8] sm:$0xff]
      %263 = vset.pattern.permute.xlu0 0
      %264 = vperm.xlu0 %263, %v260
      %v265 = vpop.permute.xlu0 %264
      %268 = vset.pattern.permute.xlu0 0
      %269 = vperm.xlu0 %268, %v261
      %v270 = vpop.permute.xlu0 %269
      %v274 = vunpack.c.l.b16 %v258
      %v275 = vunpack.c.l.b16 %v259
      %v276 = vpack.c.b16 %v275, %v274
      %vm277 = vcmask 56320
      %v279 = vsel %vm277, %v276, 0
      %vm281 = vcmask 1042432
      %vm282 = vcmask 1043456
      %v283 = vsel %vm281, 4294967295, 65535
      %v284 = vsel %vm282, %v283, 0
      %v286 = vand.u32 %v257, %v284
      %288 = vmatprep.subr.bf16.mxu0 0
      %289 = vmatpush1.bf16.msra.mxu0 %v286
      %290 = vmatprep.subr.bf16.mxu0 0
      %291 = vmatpush1.bf16.msra.mxu0 0
      %292 = vmatprep.subr.bf16.mxu0 0
      %293 = vmatpush1.bf16.msra.mxu0 0
      %294 = vmatprep.subr.bf16.mxu0 0
      %295 = vmatpush1.bf16.msra.mxu0 0
      %296 = vmatprep.subr.bf16.mxu0 0
      %297 = vmatpush1.bf16.msra.mxu0 0
      %298 = vmatprep.subr.bf16.mxu0 0
      %299 = vmatpush1.bf16.msra.mxu0 0
      %300 = vmatprep.subr.bf16.mxu0 0
      %301 = vmatpush1.bf16.msra.mxu0 0
      %302 = vmatprep.subr.bf16.mxu0 0
      %303 = vmatpush1.bf16.msra.mxu0 0
      %304 = vmatprep.subr.bf16.mxu0 0
      %305 = vmatpush1.bf16.msra.mxu0 0
      %306 = vmatprep.subr.bf16.mxu0 0
      %307 = vmatpush1.bf16.msra.mxu0 0
      %308 = vmatprep.subr.bf16.mxu0 0
      %309 = vmatpush1.bf16.msra.mxu0 0
      %310 = vmatprep.subr.bf16.mxu0 0
      %311 = vmatpush1.bf16.msra.mxu0 0
      %312 = vmatprep.subr.bf16.mxu0 0
      %313 = vmatpush1.bf16.msra.mxu0 0
      %314 = vmatprep.subr.bf16.mxu0 0
      %315 = vmatpush1.bf16.msra.mxu0 0
      %316 = vmatprep.subr.bf16.mxu0 0
      %317 = vmatpush1.bf16.msra.mxu0 0
      %318 = vmatprep.subr.bf16.mxu0 0
      %319 = vmatpush1.bf16.msra.mxu0 0
      %320 = vmatprep.mubr.bf16.mxu0 0
      %321 = vmatmul.mubr.bf16.gmra.mrb[0].mxu0 %v279
      %v322 = vpop.f32.mrb[0].mxu0
      %v323 = vadd.f32 %v265, %v322
      %v324 = vpop.f32.mrb[0].mxu0
      %v325 = vpop.f32.mrb[0].mxu0
      %v326 = vadd.f32 %v270, %v325
      %v327 = vpop.f32.mrb[0].mxu0
      %328 = vdwg.mxu0
      %v329 = vmax.f32 %v323, 0.0
      %v330 = vmax.f32 %v326, 0.0
      %v331 = vpack.c.bf16 %v330, %v329
      %v332 = vld [vmem:[%s3] sm:$0xf]
      %v333 = vld [vmem:[%s3 + $0x4] sm:$0xf]
      %v334 = vld [vmem:[%s3 + $0x8] sm:$0xf]
      %v335 = vld [vmem:[%s3 + $0xc] sm:$0xf]
      %v336 = vld [vmem:[%s4] sm:$0xff]
      %v337 = vld [vmem:[%s4 + $0x8] sm:$0xff]
      %v338 = vld [vmem:[%s4 + $0x10] sm:$0xff]
      %v339 = vld [vmem:[%s4 + $0x18] sm:$0xff]
      %341 = vset.pattern.permute.xlu0 0
      %342 = vperm.xlu0 %341, %v336
      %v343 = vpop.permute.xlu0 %342
      %346 = vset.pattern.permute.xlu0 0
      %347 = vperm.xlu0 %346, %v337
      %v348 = vpop.permute.xlu0 %347
      %351 = vset.pattern.permute.xlu0 0
      %352 = vperm.xlu0 %351, %v338
      %v353 = vpop.permute.xlu0 %352
      %356 = vset.pattern.permute.xlu0 0
      %357 = vperm.xlu0 %356, %v339
      %v358 = vpop.permute.xlu0 %357
      %v364 = vunpack.c.l.b16 %v332
      %v365 = vunpack.c.l.b16 %v333
      %v366 = vunpack.c.l.b16 %v334
      %v367 = vunpack.c.l.b16 %v335
      %v368 = vpack.c.b16 %v365, %v364
      %v369 = vpack.c.b16 %v367, %v366
      %vm370 = vcmask 130048
      %v372 = vsel %vm370, %v368, 0
      %v375 = vsel %vm370, %v369, 0
      %377 = vmatprep.subr.bf16.mxu0 0
      %378 = vmatpush1.bf16.msra.mxu0 %v331
      %379 = vmatprep.subr.bf16.mxu0 0
      %380 = vmatpush1.bf16.msra.mxu0 0
      %381 = vmatprep.subr.bf16.mxu0 0
      %382 = vmatpush1.bf16.msra.mxu0 0
      %383 = vmatprep.subr.bf16.mxu0 0
      %384 = vmatpush1.bf16.msra.mxu0 0
      %385 = vmatprep.subr.bf16.mxu0 0
      %386 = vmatpush1.bf16.msra.mxu0 0
      %387 = vmatprep.subr.bf16.mxu0 0
      %388 = vmatpush1.bf16.msra.mxu0 0
      %389 = vmatprep.subr.bf16.mxu0 0
      %390 = vmatpush1.bf16.msra.mxu0 0
      %391 = vmatprep.subr.bf16.mxu0 0
      %392 = vmatpush1.bf16.msra.mxu0 0
      %393 = vmatprep.subr.bf16.mxu0 0
      %394 = vmatpush1.bf16.msra.mxu0 0
      %395 = vmatprep.subr.bf16.mxu0 0
      %396 = vmatpush1.bf16.msra.mxu0 0
      %397 = vmatprep.subr.bf16.mxu0 0
      %398 = vmatpush1.bf16.msra.mxu0 0
      %399 = vmatprep.subr.bf16.mxu0 0
      %400 = vmatpush1.bf16.msra.mxu0 0
      %401 = vmatprep.subr.bf16.mxu0 0
      %402 = vmatpush1.bf16.msra.mxu0 0
      %403 = vmatprep.subr.bf16.mxu0 0
      %404 = vmatpush1.bf16.msra.mxu0 0
      %405 = vmatprep.subr.bf16.mxu0 0
      %406 = vmatpush1.bf16.msra.mxu0 0
      %407 = vmatprep.subr.bf16.mxu0 0
      %408 = vmatpush1.bf16.msra.mxu0 0
      %409 = vmatprep.mubr.bf16.mxu0 0
      %410 = vmatmul.mubr.bf16.gmra.mrb[0].mxu0 %v372
      %v411 = vpop.f32.mrb[0].mxu0
      %v412 = vadd.f32 %v343, %v411
      %v413 = vpop.f32.mrb[0].mxu0
      %v414 = vpop.f32.mrb[0].mxu0
      %v415 = vadd.f32 %v348, %v414
      %v416 = vpop.f32.mrb[0].mxu0
      %417 = vmatprep.mubr.bf16.mxu0 0
      %418 = vmatmul.mubr.bf16.gmra.mrb[0].mxu0 %v375
      %v419 = vpop.f32.mrb[0].mxu0
      %v420 = vadd.f32 %v353, %v419
      %v421 = vpop.f32.mrb[0].mxu0
      %v422 = vpop.f32.mrb[0].mxu0
      %v423 = vadd.f32 %v358, %v422
      %v424 = vpop.f32.mrb[0].mxu0
      %425 = vdwg.mxu0
      %v426 = vmax.f32 %v412, 0.0
      %v427 = vmax.f32 %v415, 0.0
      %v428 = vmax.f32 %v420, 0.0
      %v429 = vmax.f32 %v423, 0.0
      %s430 = scalar_lea.vmem %s247, 4
      %v431 = vld [vmem:[%s430] sm:$0xf]
      %v433 = vand.u32 %v431, %v284
      %435 = vmatprep.subr.bf16.mxu0 0
      %436 = vmatpush1.bf16.msra.mxu0 %v433
      %437 = vmatprep.subr.bf16.mxu0 0
      %438 = vmatpush1.bf16.msra.mxu0 0
      %439 = vmatprep.subr.bf16.mxu0 0
      %440 = vmatpush1.bf16.msra.mxu0 0
      %441 = vmatprep.subr.bf16.mxu0 0
      %442 = vmatpush1.bf16.msra.mxu0 0
      %443 = vmatprep.subr.bf16.mxu0 0
      %444 = vmatpush1.bf16.msra.mxu0 0
      %445 = vmatprep.subr.bf16.mxu0 0
      %446 = vmatpush1.bf16.msra.mxu0 0
      %447 = vmatprep.subr.bf16.mxu0 0
      %448 = vmatpush1.bf16.msra.mxu0 0
      %449 = vmatprep.subr.bf16.mxu0 0
      %450 = vmatpush1.bf16.msra.mxu0 0
      %451 = vmatprep.subr.bf16.mxu0 0
      %452 = vmatpush1.bf16.msra.mxu0 0
      %453 = vmatprep.subr.bf16.mxu0 0
      %454 = vmatpush1.bf16.msra.mxu0 0
      %455 = vmatprep.subr.bf16.mxu0 0
      %456 = vmatpush1.bf16.msra.mxu0 0
      %457 = vmatprep.subr.bf16.mxu0 0
      %458 = vmatpush1.bf16.msra.mxu0 0
      %459 = vmatprep.subr.bf16.mxu0 0
      %460 = vmatpush1.bf16.msra.mxu0 0
      %461 = vmatprep.subr.bf16.mxu0 0
      %462 = vmatpush1.bf16.msra.mxu0 0
      %463 = vmatprep.subr.bf16.mxu0 0
      %464 = vmatpush1.bf16.msra.mxu0 0
      %465 = vmatprep.subr.bf16.mxu0 0
      %466 = vmatpush1.bf16.msra.mxu0 0
      %467 = vmatprep.mubr.bf16.mxu0 0
      %468 = vmatmul.mubr.bf16.gmra.mrb[0].mxu0 %v279
      %v469 = vpop.f32.mrb[0].mxu0
      %v470 = vadd.f32 %v265, %v469
      %v471 = vpop.f32.mrb[0].mxu0
      %v472 = vpop.f32.mrb[0].mxu0
      %v473 = vadd.f32 %v270, %v472
      %v474 = vpop.f32.mrb[0].mxu0
      %475 = vdwg.mxu0
      %v476 = vmax.f32 %v470, 0.0
      %v477 = vmax.f32 %v473, 0.0
      %v478 = vpack.c.bf16 %v477, %v476
      %479 = vmatprep.subr.bf16.mxu0 0
      %480 = vmatpush1.bf16.msra.mxu0 %v478
      %481 = vmatprep.subr.bf16.mxu0 0
      %482 = vmatpush1.bf16.msra.mxu0 0
      %483 = vmatprep.subr.bf16.mxu0 0
      %484 = vmatpush1.bf16.msra.mxu0 0
      %485 = vmatprep.subr.bf16.mxu0 0
      %486 = vmatpush1.bf16.msra.mxu0 0
      %487 = vmatprep.subr.bf16.mxu0 0
      %488 = vmatpush1.bf16.msra.mxu0 0
      %489 = vmatprep.subr.bf16.mxu0 0
      %490 = vmatpush1.bf16.msra.mxu0 0
      %491 = vmatprep.subr.bf16.mxu0 0
      %492 = vmatpush1.bf16.msra.mxu0 0
      %493 = vmatprep.subr.bf16.mxu0 0
      %494 = vmatpush1.bf16.msra.mxu0 0
      %495 = vmatprep.subr.bf16.mxu0 0
      %496 = vmatpush1.bf16.msra.mxu0 0
      %497 = vmatprep.subr.bf16.mxu0 0
      %498 = vmatpush1.bf16.msra.mxu0 0
      %499 = vmatprep.subr.bf16.mxu0 0
      %500 = vmatpush1.bf16.msra.mxu0 0
      %501 = vmatprep.subr.bf16.mxu0 0
      %502 = vmatpush1.bf16.msra.mxu0 0
      %503 = vmatprep.subr.bf16.mxu0 0
      %504 = vmatpush1.bf16.msra.mxu0 0
      %505 = vmatprep.subr.bf16.mxu0 0
      %506 = vmatpush1.bf16.msra.mxu0 0
      %507 = vmatprep.subr.bf16.mxu0 0
      %508 = vmatpush1.bf16.msra.mxu0 0
      %509 = vmatprep.subr.bf16.mxu0 0
      %510 = vmatpush1.bf16.msra.mxu0 0
      %511 = vmatprep.mubr.bf16.mxu0 0
      %512 = vmatmul.mubr.bf16.gmra.mrb[0].mxu0 %v372
      %v513 = vpop.f32.mrb[0].mxu0
      %v514 = vadd.f32 %v343, %v513
      %v515 = vpop.f32.mrb[0].mxu0
      %v516 = vpop.f32.mrb[0].mxu0
      %v517 = vadd.f32 %v348, %v516
      %v518 = vpop.f32.mrb[0].mxu0
      %519 = vmatprep.mubr.bf16.mxu0 0
      %520 = vmatmul.mubr.bf16.gmra.mrb[0].mxu0 %v375
      %v521 = vpop.f32.mrb[0].mxu0
      %v522 = vadd.f32 %v353, %v521
      %v523 = vpop.f32.mrb[0].mxu0
      %v524 = vpop.f32.mrb[0].mxu0
      %v525 = vadd.f32 %v358, %v524
      %v526 = vpop.f32.mrb[0].mxu0
      %527 = vdwg.mxu0
      %v528 = vmax.f32 %v514, 0.0
      %v529 = vmax.f32 %v517, 0.0
      %v530 = vmax.f32 %v522, 0.0
      %v531 = vmax.f32 %v525, 0.0
      %v532 = vmax.f32 %v426, %v528
      %v533 = vmax.f32 %v427, %v529
      %v534 = vmax.f32 %v428, %v530
      %v535 = vmax.f32 %v429, %v531
      %s536 = scalar_lea.vmem %s247, 8
      %v537 = vld [vmem:[%s536] sm:$0xf]
      %v539 = vand.u32 %v537, %v284
      %541 = vmatprep.subr.bf16.mxu0 0
      %542 = vmatpush1.bf16.msra.mxu0 %v539
      %543 = vmatprep.subr.bf16.mxu0 0
      %544 = vmatpush1.bf16.msra.mxu0 0
      %545 = vmatprep.subr.bf16.mxu0 0
      %546 = vmatpush1.bf16.msra.mxu0 0
      %547 = vmatprep.subr.bf16.mxu0 0
      %548 = vmatpush1.bf16.msra.mxu0 0
      %549 = vmatprep.subr.bf16.mxu0 0
      %550 = vmatpush1.bf16.msra.mxu0 0
      %551 = vmatprep.subr.bf16.mxu0 0
      %552 = vmatpush1.bf16.msra.mxu0 0
      %553 = vmatprep.subr.bf16.mxu0 0
      %554 = vmatpush1.bf16.msra.mxu0 0
      %555 = vmatprep.subr.bf16.mxu0 0
      %556 = vmatpush1.bf16.msra.mxu0 0
      %557 = vmatprep.subr.bf16.mxu0 0
      %558 = vmatpush1.bf16.msra.mxu0 0
      %559 = vmatprep.subr.bf16.mxu0 0
      %560 = vmatpush1.bf16.msra.mxu0 0
      %561 = vmatprep.subr.bf16.mxu0 0
      %562 = vmatpush1.bf16.msra.mxu0 0
      %563 = vmatprep.subr.bf16.mxu0 0
      %564 = vmatpush1.bf16.msra.mxu0 0
      %565 = vmatprep.subr.bf16.mxu0 0
      %566 = vmatpush1.bf16.msra.mxu0 0
      %567 = vmatprep.subr.bf16.mxu0 0
      %568 = vmatpush1.bf16.msra.mxu0 0
      %569 = vmatprep.subr.bf16.mxu0 0
      %570 = vmatpush1.bf16.msra.mxu0 0
      %571 = vmatprep.subr.bf16.mxu0 0
      %572 = vmatpush1.bf16.msra.mxu0 0
      %573 = vmatprep.mubr.bf16.mxu0 0
      %574 = vmatmul.mubr.bf16.gmra.mrb[0].mxu0 %v279
      %v575 = vpop.f32.mrb[0].mxu0
      %v576 = vadd.f32 %v265, %v575
      %v577 = vpop.f32.mrb[0].mxu0
      %v578 = vpop.f32.mrb[0].mxu0
      %v579 = vadd.f32 %v270, %v578
      %v580 = vpop.f32.mrb[0].mxu0
      %581 = vdwg.mxu0
      %v582 = vmax.f32 %v576, 0.0
      %v583 = vmax.f32 %v579, 0.0
      %v584 = vpack.c.bf16 %v583, %v582
      %585 = vmatprep.subr.bf16.mxu0 0
      %586 = vmatpush1.bf16.msra.mxu0 %v584
      %587 = vmatprep.subr.bf16.mxu0 0
      %588 = vmatpush1.bf16.msra.mxu0 0
      %589 = vmatprep.subr.bf16.mxu0 0
      %590 = vmatpush1.bf16.msra.mxu0 0
      %591 = vmatprep.subr.bf16.mxu0 0
      %592 = vmatpush1.bf16.msra.mxu0 0
      %593 = vmatprep.subr.bf16.mxu0 0
      %594 = vmatpush1.bf16.msra.mxu0 0
      %595 = vmatprep.subr.bf16.mxu0 0
      %596 = vmatpush1.bf16.msra.mxu0 0
      %597 = vmatprep.subr.bf16.mxu0 0
      %598 = vmatpush1.bf16.msra.mxu0 0
      %599 = vmatprep.subr.bf16.mxu0 0
      %600 = vmatpush1.bf16.msra.mxu0 0
      %601 = vmatprep.subr.bf16.mxu0 0
      %602 = vmatpush1.bf16.msra.mxu0 0
      %603 = vmatprep.subr.bf16.mxu0 0
      %604 = vmatpush1.bf16.msra.mxu0 0
      %605 = vmatprep.subr.bf16.mxu0 0
      %606 = vmatpush1.bf16.msra.mxu0 0
      %607 = vmatprep.subr.bf16.mxu0 0
      %608 = vmatpush1.bf16.msra.mxu0 0
      %609 = vmatprep.subr.bf16.mxu0 0
      %610 = vmatpush1.bf16.msra.mxu0 0
      %611 = vmatprep.subr.bf16.mxu0 0
      %612 = vmatpush1.bf16.msra.mxu0 0
      %613 = vmatprep.subr.bf16.mxu0 0
      %614 = vmatpush1.bf16.msra.mxu0 0
      %615 = vmatprep.subr.bf16.mxu0 0
      %616 = vmatpush1.bf16.msra.mxu0 0
      %617 = vmatprep.mubr.bf16.mxu0 0
      %618 = vmatmul.mubr.bf16.gmra.mrb[0].mxu0 %v372
      %v619 = vpop.f32.mrb[0].mxu0
      %v620 = vadd.f32 %v343, %v619
      %v621 = vpop.f32.mrb[0].mxu0
      %v622 = vpop.f32.mrb[0].mxu0
      %v623 = vadd.f32 %v348, %v622
      %v624 = vpop.f32.mrb[0].mxu0
      %625 = vmatprep.mubr.bf16.mxu0 0
      %626 = vmatmul.mubr.bf16.gmra.mrb[0].mxu0 %v375
      %v627 = vpop.f32.mrb[0].mxu0
      %v628 = vadd.f32 %v353, %v627
      %v629 = vpop.f32.mrb[0].mxu0
      %v630 = vpop.f32.mrb[0].mxu0
      %v631 = vadd.f32 %v358, %v630
      %v632 = vpop.f32.mrb[0].mxu0
      %633 = vdwg.mxu0
      %v634 = vmax.f32 %v620, 0.0
      %v635 = vmax.f32 %v623, 0.0
      %v636 = vmax.f32 %v628, 0.0
      %v637 = vmax.f32 %v631, 0.0
      %v638 = vmax.f32 %v532, %v634
      %v639 = vmax.f32 %v533, %v635
      %v640 = vmax.f32 %v534, %v636
      %v641 = vmax.f32 %v535, %v637
      %s642 = scalar_lea.vmem %s247, 12
      %v643 = vld [vmem:[%s642] sm:$0xf]
      %v645 = vand.u32 %v643, %v284
      %647 = vmatprep.subr.bf16.mxu0 0
      %648 = vmatpush1.bf16.msra.mxu0 %v645
      %649 = vmatprep.subr.bf16.mxu0 0
      %650 = vmatpush1.bf16.msra.mxu0 0
      %651 = vmatprep.subr.bf16.mxu0 0
      %652 = vmatpush1.bf16.msra.mxu0 0
      %653 = vmatprep.subr.bf16.mxu0 0
      %654 = vmatpush1.bf16.msra.mxu0 0
      %655 = vmatprep.subr.bf16.mxu0 0
      %656 = vmatpush1.bf16.msra.mxu0 0
      %657 = vmatprep.subr.bf16.mxu0 0
      %658 = vmatpush1.bf16.msra.mxu0 0
      %659 = vmatprep.subr.bf16.mxu0 0
      %660 = vmatpush1.bf16.msra.mxu0 0
      %661 = vmatprep.subr.bf16.mxu0 0
      %662 = vmatpush1.bf16.msra.mxu0 0
      %663 = vmatprep.subr.bf16.mxu0 0
      %664 = vmatpush1.bf16.msra.mxu0 0
      %665 = vmatprep.subr.bf16.mxu0 0
      %666 = vmatpush1.bf16.msra.mxu0 0
      %667 = vmatprep.subr.bf16.mxu0 0
      %668 = vmatpush1.bf16.msra.mxu0 0
      %669 = vmatprep.subr.bf16.mxu0 0
      %670 = vmatpush1.bf16.msra.mxu0 0
      %671 = vmatprep.subr.bf16.mxu0 0
      %672 = vmatpush1.bf16.msra.mxu0 0
      %673 = vmatprep.subr.bf16.mxu0 0
      %674 = vmatpush1.bf16.msra.mxu0 0
      %675 = vmatprep.subr.bf16.mxu0 0
      %676 = vmatpush1.bf16.msra.mxu0 0
      %677 = vmatprep.subr.bf16.mxu0 0
      %678 = vmatpush1.bf16.msra.mxu0 0
      %679 = vmatprep.mubr.bf16.mxu0 0
      %680 = vmatmul.mubr.bf16.gmra.mrb[0].mxu0 %v279
      %v681 = vpop.f32.mrb[0].mxu0
      %v682 = vadd.f32 %v265, %v681
      %v683 = vpop.f32.mrb[0].mxu0
      %v684 = vpop.f32.mrb[0].mxu0
      %v685 = vadd.f32 %v270, %v684
      %v686 = vpop.f32.mrb[0].mxu0
      %687 = vdwg.mxu0
      %v688 = vmax.f32 %v682, 0.0
      %v689 = vmax.f32 %v685, 0.0
      %v690 = vpack.c.bf16 %v689, %v688
      %691 = vmatprep.subr.bf16.mxu0 0
      %692 = vmatpush1.bf16.msra.mxu0 %v690
      %693 = vmatprep.subr.bf16.mxu0 0
      %694 = vmatpush1.bf16.msra.mxu0 0
      %695 = vmatprep.subr.bf16.mxu0 0
      %696 = vmatpush1.bf16.msra.mxu0 0
      %697 = vmatprep.subr.bf16.mxu0 0
      %698 = vmatpush1.bf16.msra.mxu0 0
      %699 = vmatprep.subr.bf16.mxu0 0
      %700 = vmatpush1.bf16.msra.mxu0 0
      %701 = vmatprep.subr.bf16.mxu0 0
      %702 = vmatpush1.bf16.msra.mxu0 0
      %703 = vmatprep.subr.bf16.mxu0 0
      %704 = vmatpush1.bf16.msra.mxu0 0
      %705 = vmatprep.subr.bf16.mxu0 0
      %706 = vmatpush1.bf16.msra.mxu0 0
      %707 = vmatprep.subr.bf16.mxu0 0
      %708 = vmatpush1.bf16.msra.mxu0 0
      %709 = vmatprep.subr.bf16.mxu0 0
      %710 = vmatpush1.bf16.msra.mxu0 0
      %711 = vmatprep.subr.bf16.mxu0 0
      %712 = vmatpush1.bf16.msra.mxu0 0
      %713 = vmatprep.subr.bf16.mxu0 0
      %714 = vmatpush1.bf16.msra.mxu0 0
      %715 = vmatprep.subr.bf16.mxu0 0
      %716 = vmatpush1.bf16.msra.mxu0 0
      %717 = vmatprep.subr.bf16.mxu0 0
      %718 = vmatpush1.bf16.msra.mxu0 0
      %719 = vmatprep.subr.bf16.mxu0 0
      %720 = vmatpush1.bf16.msra.mxu0 0
      %721 = vmatprep.subr.bf16.mxu0 0
      %722 = vmatpush1.bf16.msra.mxu0 0
      %723 = vmatprep.mubr.bf16.mxu0 0
      %724 = vmatmul.mubr.bf16.gmra.mrb[0].mxu0 %v372
      %v725 = vpop.f32.mrb[0].mxu0
      %v726 = vadd.f32 %v343, %v725
      %v727 = vpop.f32.mrb[0].mxu0
      %v728 = vpop.f32.mrb[0].mxu0
      %v729 = vadd.f32 %v348, %v728
      %v730 = vpop.f32.mrb[0].mxu0
      %731 = vmatprep.mubr.bf16.mxu0 0
      %732 = vmatmul.mubr.bf16.gmra.mrb[0].mxu0 %v375
      %v733 = vpop.f32.mrb[0].mxu0
      %v734 = vadd.f32 %v353, %v733
      %v735 = vpop.f32.mrb[0].mxu0
      %v736 = vpop.f32.mrb[0].mxu0
      %v737 = vadd.f32 %v358, %v736
      %v738 = vpop.f32.mrb[0].mxu0
      %739 = vdwg.mxu0
      %v740 = vmax.f32 %v726, 0.0
      %v741 = vmax.f32 %v729, 0.0
      %v742 = vmax.f32 %v734, 0.0
      %v743 = vmax.f32 %v737, 0.0
      %v744 = vmax.f32 %v638, %v740
      %v745 = vmax.f32 %v639, %v741
      %v746 = vmax.f32 %v640, %v742
      %v747 = vmax.f32 %v641, %v743
      %s748 = scalar_lea.vmem %s247, 16
      %v749 = vld [vmem:[%s748] sm:$0xf]
      %v751 = vand.u32 %v749, %v284
      %753 = vmatprep.subr.bf16.mxu0 0
      %754 = vmatpush1.bf16.msra.mxu0 %v751
      %755 = vmatprep.subr.bf16.mxu0 0
      %756 = vmatpush1.bf16.msra.mxu0 0
      %757 = vmatprep.subr.bf16.mxu0 0
      %758 = vmatpush1.bf16.msra.mxu0 0
      %759 = vmatprep.subr.bf16.mxu0 0
      %760 = vmatpush1.bf16.msra.mxu0 0
      %761 = vmatprep.subr.bf16.mxu0 0
      %762 = vmatpush1.bf16.msra.mxu0 0
      %763 = vmatprep.subr.bf16.mxu0 0
      %764 = vmatpush1.bf16.msra.mxu0 0
      %765 = vmatprep.subr.bf16.mxu0 0
      %766 = vmatpush1.bf16.msra.mxu0 0
      %767 = vmatprep.subr.bf16.mxu0 0
      %768 = vmatpush1.bf16.msra.mxu0 0
      %769 = vmatprep.subr.bf16.mxu0 0
      %770 = vmatpush1.bf16.msra.mxu0 0
      %771 = vmatprep.subr.bf16.mxu0 0
      %772 = vmatpush1.bf16.msra.mxu0 0
      %773 = vmatprep.subr.bf16.mxu0 0
      %774 = vmatpush1.bf16.msra.mxu0 0
      %775 = vmatprep.subr.bf16.mxu0 0
      %776 = vmatpush1.bf16.msra.mxu0 0
      %777 = vmatprep.subr.bf16.mxu0 0
      %778 = vmatpush1.bf16.msra.mxu0 0
      %779 = vmatprep.subr.bf16.mxu0 0
      %780 = vmatpush1.bf16.msra.mxu0 0
      %781 = vmatprep.subr.bf16.mxu0 0
      %782 = vmatpush1.bf16.msra.mxu0 0
      %783 = vmatprep.subr.bf16.mxu0 0
      %784 = vmatpush1.bf16.msra.mxu0 0
      %785 = vmatprep.mubr.bf16.mxu0 0
      %786 = vmatmul.mubr.bf16.gmra.mrb[0].mxu0 %v279
      %v787 = vpop.f32.mrb[0].mxu0
      %v788 = vadd.f32 %v265, %v787
      %v789 = vpop.f32.mrb[0].mxu0
      %v790 = vpop.f32.mrb[0].mxu0
      %v791 = vadd.f32 %v270, %v790
      %v792 = vpop.f32.mrb[0].mxu0
      %793 = vdwg.mxu0
      %v794 = vmax.f32 %v788, 0.0
      %v795 = vmax.f32 %v791, 0.0
      %v796 = vpack.c.bf16 %v795, %v794
      %797 = vmatprep.subr.bf16.mxu0 0
      %798 = vmatpush1.bf16.msra.mxu0 %v796
      %799 = vmatprep.subr.bf16.mxu0 0
      %800 = vmatpush1.bf16.msra.mxu0 0
      %801 = vmatprep.subr.bf16.mxu0 0
      %802 = vmatpush1.bf16.msra.mxu0 0
      %803 = vmatprep.subr.bf16.mxu0 0
      %804 = vmatpush1.bf16.msra.mxu0 0
      %805 = vmatprep.subr.bf16.mxu0 0
      %806 = vmatpush1.bf16.msra.mxu0 0
      %807 = vmatprep.subr.bf16.mxu0 0
      %808 = vmatpush1.bf16.msra.mxu0 0
      %809 = vmatprep.subr.bf16.mxu0 0
      %810 = vmatpush1.bf16.msra.mxu0 0
      %811 = vmatprep.subr.bf16.mxu0 0
      %812 = vmatpush1.bf16.msra.mxu0 0
      %813 = vmatprep.subr.bf16.mxu0 0
      %814 = vmatpush1.bf16.msra.mxu0 0
      %815 = vmatprep.subr.bf16.mxu0 0
      %816 = vmatpush1.bf16.msra.mxu0 0
      %817 = vmatprep.subr.bf16.mxu0 0
      %818 = vmatpush1.bf16.msra.mxu0 0
      %819 = vmatprep.subr.bf16.mxu0 0
      %820 = vmatpush1.bf16.msra.mxu0 0
      %821 = vmatprep.subr.bf16.mxu0 0
      %822 = vmatpush1.bf16.msra.mxu0 0
      %823 = vmatprep.subr.bf16.mxu0 0
      %824 = vmatpush1.bf16.msra.mxu0 0
      %825 = vmatprep.subr.bf16.mxu0 0
      %826 = vmatpush1.bf16.msra.mxu0 0
      %827 = vmatprep.subr.bf16.mxu0 0
      %828 = vmatpush1.bf16.msra.mxu0 0
      %829 = vmatprep.mubr.bf16.mxu0 0
      %830 = vmatmul.mubr.bf16.gmra.mrb[0].mxu0 %v372
      %v831 = vpop.f32.mrb[0].mxu0
      %v832 = vadd.f32 %v343, %v831
      %v833 = vpop.f32.mrb[0].mxu0
      %v834 = vpop.f32.mrb[0].mxu0
      %v835 = vadd.f32 %v348, %v834
      %v836 = vpop.f32.mrb[0].mxu0
      %837 = vmatprep.mubr.bf16.mxu0 0
      %838 = vmatmul.mubr.bf16.gmra.mrb[0].mxu0 %v375
      %v839 = vpop.f32.mrb[0].mxu0
      %v840 = vadd.f32 %v353, %v839
      %v841 = vpop.f32.mrb[0].mxu0
      %v842 = vpop.f32.mrb[0].mxu0
      %v843 = vadd.f32 %v358, %v842
      %v844 = vpop.f32.mrb[0].mxu0
      %845 = vdwg.mxu0
      %v846 = vmax.f32 %v832, 0.0
      %v847 = vmax.f32 %v835, 0.0
      %v848 = vmax.f32 %v840, 0.0
      %v849 = vmax.f32 %v843, 0.0
      %v850 = vmax.f32 %v744, %v846
      %v851 = vmax.f32 %v745, %v847
      %v852 = vmax.f32 %v746, %v848
      %v853 = vmax.f32 %v747, %v849
      %s854 = scalar_lea.vmem %s247, 20
      %v855 = vld [vmem:[%s854] sm:$0xf]
      %v857 = vand.u32 %v855, %v284
      %859 = vmatprep.subr.bf16.mxu0 0
      %860 = vmatpush1.bf16.msra.mxu0 %v857
      %861 = vmatprep.subr.bf16.mxu0 0
      %862 = vmatpush1.bf16.msra.mxu0 0
      %863 = vmatprep.subr.bf16.mxu0 0
      %864 = vmatpush1.bf16.msra.mxu0 0
      %865 = vmatprep.subr.bf16.mxu0 0
      %866 = vmatpush1.bf16.msra.mxu0 0
      %867 = vmatprep.subr.bf16.mxu0 0
      %868 = vmatpush1.bf16.msra.mxu0 0
      %869 = vmatprep.subr.bf16.mxu0 0
      %870 = vmatpush1.bf16.msra.mxu0 0
      %871 = vmatprep.subr.bf16.mxu0 0
      %872 = vmatpush1.bf16.msra.mxu0 0
      %873 = vmatprep.subr.bf16.mxu0 0
      %874 = vmatpush1.bf16.msra.mxu0 0
      %875 = vmatprep.subr.bf16.mxu0 0
      %876 = vmatpush1.bf16.msra.mxu0 0
      %877 = vmatprep.subr.bf16.mxu0 0
      %878 = vmatpush1.bf16.msra.mxu0 0
      %879 = vmatprep.subr.bf16.mxu0 0
      %880 = vmatpush1.bf16.msra.mxu0 0
      %881 = vmatprep.subr.bf16.mxu0 0
      %882 = vmatpush1.bf16.msra.mxu0 0
      %883 = vmatprep.subr.bf16.mxu0 0
      %884 = vmatpush1.bf16.msra.mxu0 0
      %885 = vmatprep.subr.bf16.mxu0 0
      %886 = vmatpush1.bf16.msra.mxu0 0
      %887 = vmatprep.subr.bf16.mxu0 0
      %888 = vmatpush1.bf16.msra.mxu0 0
      %889 = vmatprep.subr.bf16.mxu0 0
      %890 = vmatpush1.bf16.msra.mxu0 0
      %891 = vmatprep.mubr.bf16.mxu0 0
      %892 = vmatmul.mubr.bf16.gmra.mrb[0].mxu0 %v279
      %v893 = vpop.f32.mrb[0].mxu0
      %v894 = vadd.f32 %v265, %v893
      %v895 = vpop.f32.mrb[0].mxu0
      %v896 = vpop.f32.mrb[0].mxu0
      %v897 = vadd.f32 %v270, %v896
      %v898 = vpop.f32.mrb[0].mxu0
      %899 = vdwg.mxu0
      %v900 = vmax.f32 %v894, 0.0
      %v901 = vmax.f32 %v897, 0.0
      %v902 = vpack.c.bf16 %v901, %v900
      %903 = vmatprep.subr.bf16.mxu0 0
      %904 = vmatpush1.bf16.msra.mxu0 %v902
      %905 = vmatprep.subr.bf16.mxu0 0
      %906 = vmatpush1.bf16.msra.mxu0 0
      %907 = vmatprep.subr.bf16.mxu0 0
      %908 = vmatpush1.bf16.msra.mxu0 0
      %909 = vmatprep.subr.bf16.mxu0 0
      %910 = vmatpush1.bf16.msra.mxu0 0
      %911 = vmatprep.subr.bf16.mxu0 0
      %912 = vmatpush1.bf16.msra.mxu0 0
      %913 = vmatprep.subr.bf16.mxu0 0
      %914 = vmatpush1.bf16.msra.mxu0 0
      %915 = vmatprep.subr.bf16.mxu0 0
      %916 = vmatpush1.bf16.msra.mxu0 0
      %917 = vmatprep.subr.bf16.mxu0 0
      %918 = vmatpush1.bf16.msra.mxu0 0
      %919 = vmatprep.subr.bf16.mxu0 0
      %920 = vmatpush1.bf16.msra.mxu0 0
      %921 = vmatprep.subr.bf16.mxu0 0
      %922 = vmatpush1.bf16.msra.mxu0 0
      %923 = vmatprep.subr.bf16.mxu0 0
      %924 = vmatpush1.bf16.msra.mxu0 0
      %925 = vmatprep.subr.bf16.mxu0 0
      %926 = vmatpush1.bf16.msra.mxu0 0
      %927 = vmatprep.subr.bf16.mxu0 0
      %928 = vmatpush1.bf16.msra.mxu0 0
      %929 = vmatprep.subr.bf16.mxu0 0
      %930 = vmatpush1.bf16.msra.mxu0 0
      %931 = vmatprep.subr.bf16.mxu0 0
      %932 = vmatpush1.bf16.msra.mxu0 0
      %933 = vmatprep.subr.bf16.mxu0 0
      %934 = vmatpush1.bf16.msra.mxu0 0
      %935 = vmatprep.mubr.bf16.mxu0 0
      %936 = vmatmul.mubr.bf16.gmra.mrb[0].mxu0 %v372
      %v937 = vpop.f32.mrb[0].mxu0
      %v938 = vadd.f32 %v343, %v937
      %v939 = vpop.f32.mrb[0].mxu0
      %v940 = vpop.f32.mrb[0].mxu0
      %v941 = vadd.f32 %v348, %v940
      %v942 = vpop.f32.mrb[0].mxu0
      %943 = vmatprep.mubr.bf16.mxu0 0
      %944 = vmatmul.mubr.bf16.gmra.mrb[0].mxu0 %v375
      %v945 = vpop.f32.mrb[0].mxu0
      %v946 = vadd.f32 %v353, %v945
      %v947 = vpop.f32.mrb[0].mxu0
      %v948 = vpop.f32.mrb[0].mxu0
      %v949 = vadd.f32 %v358, %v948
      %v950 = vpop.f32.mrb[0].mxu0
      %951 = vdwg.mxu0
      %v952 = vmax.f32 %v938, 0.0
      %v953 = vmax.f32 %v941, 0.0
      %v954 = vmax.f32 %v946, 0.0
      %v955 = vmax.f32 %v949, 0.0
      %v956 = vmax.f32 %v850, %v952
      %v957 = vmax.f32 %v851, %v953
      %v958 = vmax.f32 %v852, %v954
      %v959 = vmax.f32 %v853, %v955
      %s960 = scalar_lea.vmem %s247, 24
      %v961 = vld [vmem:[%s960] sm:$0xf]
      %v963 = vand.u32 %v961, %v284
      %965 = vmatprep.subr.bf16.mxu0 0
      %966 = vmatpush1.bf16.msra.mxu0 %v963
      %967 = vmatprep.subr.bf16.mxu0 0
      %968 = vmatpush1.bf16.msra.mxu0 0
      %969 = vmatprep.subr.bf16.mxu0 0
      %970 = vmatpush1.bf16.msra.mxu0 0
      %971 = vmatprep.subr.bf16.mxu0 0
      %972 = vmatpush1.bf16.msra.mxu0 0
      %973 = vmatprep.subr.bf16.mxu0 0
      %974 = vmatpush1.bf16.msra.mxu0 0
      %975 = vmatprep.subr.bf16.mxu0 0
      %976 = vmatpush1.bf16.msra.mxu0 0
      %977 = vmatprep.subr.bf16.mxu0 0
      %978 = vmatpush1.bf16.msra.mxu0 0
      %979 = vmatprep.subr.bf16.mxu0 0
      %980 = vmatpush1.bf16.msra.mxu0 0
      %981 = vmatprep.subr.bf16.mxu0 0
      %982 = vmatpush1.bf16.msra.mxu0 0
      %983 = vmatprep.subr.bf16.mxu0 0
      %984 = vmatpush1.bf16.msra.mxu0 0
      %985 = vmatprep.subr.bf16.mxu0 0
      %986 = vmatpush1.bf16.msra.mxu0 0
      %987 = vmatprep.subr.bf16.mxu0 0
      %988 = vmatpush1.bf16.msra.mxu0 0
      %989 = vmatprep.subr.bf16.mxu0 0
      %990 = vmatpush1.bf16.msra.mxu0 0
      %991 = vmatprep.subr.bf16.mxu0 0
      %992 = vmatpush1.bf16.msra.mxu0 0
      %993 = vmatprep.subr.bf16.mxu0 0
      %994 = vmatpush1.bf16.msra.mxu0 0
      %995 = vmatprep.subr.bf16.mxu0 0
      %996 = vmatpush1.bf16.msra.mxu0 0
      %997 = vmatprep.mubr.bf16.mxu0 0
      %998 = vmatmul.mubr.bf16.gmra.mrb[0].mxu0 %v279
      %v999 = vpop.f32.mrb[0].mxu0
      %v1000 = vadd.f32 %v265, %v999
      %v1001 = vpop.f32.mrb[0].mxu0
      %v1002 = vpop.f32.mrb[0].mxu0
      %v1003 = vadd.f32 %v270, %v1002
      %v1004 = vpop.f32.mrb[0].mxu0
      %1005 = vdwg.mxu0
      %v1006 = vmax.f32 %v1000, 0.0
      %v1007 = vmax.f32 %v1003, 0.0
      %v1008 = vpack.c.bf16 %v1007, %v1006
      %1009 = vmatprep.subr.bf16.mxu0 0
      %1010 = vmatpush1.bf16.msra.mxu0 %v1008
      %1011 = vmatprep.subr.bf16.mxu0 0
      %1012 = vmatpush1.bf16.msra.mxu0 0
      %1013 = vmatprep.subr.bf16.mxu0 0
      %1014 = vmatpush1.bf16.msra.mxu0 0
      %1015 = vmatprep.subr.bf16.mxu0 0
      %1016 = vmatpush1.bf16.msra.mxu0 0
      %1017 = vmatprep.subr.bf16.mxu0 0
      %1018 = vmatpush1.bf16.msra.mxu0 0
      %1019 = vmatprep.subr.bf16.mxu0 0
      %1020 = vmatpush1.bf16.msra.mxu0 0
      %1021 = vmatprep.subr.bf16.mxu0 0
      %1022 = vmatpush1.bf16.msra.mxu0 0
      %1023 = vmatprep.subr.bf16.mxu0 0
      %1024 = vmatpush1.bf16.msra.mxu0 0
      %1025 = vmatprep.subr.bf16.mxu0 0
      %1026 = vmatpush1.bf16.msra.mxu0 0
      %1027 = vmatprep.subr.bf16.mxu0 0
      %1028 = vmatpush1.bf16.msra.mxu0 0
      %1029 = vmatprep.subr.bf16.mxu0 0
      %1030 = vmatpush1.bf16.msra.mxu0 0
      %1031 = vmatprep.subr.bf16.mxu0 0
      %1032 = vmatpush1.bf16.msra.mxu0 0
      %1033 = vmatprep.subr.bf16.mxu0 0
      %1034 = vmatpush1.bf16.msra.mxu0 0
      %1035 = vmatprep.subr.bf16.mxu0 0
      %1036 = vmatpush1.bf16.msra.mxu0 0
      %1037 = vmatprep.subr.bf16.mxu0 0
      %1038 = vmatpush1.bf16.msra.mxu0 0
      %1039 = vmatprep.subr.bf16.mxu0 0
      %1040 = vmatpush1.bf16.msra.mxu0 0
      %1041 = vmatprep.mubr.bf16.mxu0 0
      %1042 = vmatmul.mubr.bf16.gmra.mrb[0].mxu0 %v372
      %v1043 = vpop.f32.mrb[0].mxu0
      %v1044 = vadd.f32 %v343, %v1043
      %v1045 = vpop.f32.mrb[0].mxu0
      %v1046 = vpop.f32.mrb[0].mxu0
      %v1047 = vadd.f32 %v348, %v1046
      %v1048 = vpop.f32.mrb[0].mxu0
      %1049 = vmatprep.mubr.bf16.mxu0 0
      %1050 = vmatmul.mubr.bf16.gmra.mrb[0].mxu0 %v375
      %v1051 = vpop.f32.mrb[0].mxu0
      %v1052 = vadd.f32 %v353, %v1051
      %v1053 = vpop.f32.mrb[0].mxu0
      %v1054 = vpop.f32.mrb[0].mxu0
      %v1055 = vadd.f32 %v358, %v1054
      %v1056 = vpop.f32.mrb[0].mxu0
      %1057 = vdwg.mxu0
      %v1058 = vmax.f32 %v1044, 0.0
      %v1059 = vmax.f32 %v1047, 0.0
      %v1060 = vmax.f32 %v1052, 0.0
      %v1061 = vmax.f32 %v1055, 0.0
      %v1062 = vmax.f32 %v956, %v1058
      %v1063 = vmax.f32 %v957, %v1059
      %v1064 = vmax.f32 %v958, %v1060
      %v1065 = vmax.f32 %v959, %v1061
      %s1066 = scalar_lea.vmem %s247, 28
      %v1067 = vld [vmem:[%s1066] sm:$0xf]
      %v1069 = vand.u32 %v1067, %v284
      %1071 = vmatprep.subr.bf16.mxu0 0
      %1072 = vmatpush1.bf16.msra.mxu0 %v1069
      %1073 = vmatprep.subr.bf16.mxu0 0
      %1074 = vmatpush1.bf16.msra.mxu0 0
      %1075 = vmatprep.subr.bf16.mxu0 0
      %1076 = vmatpush1.bf16.msra.mxu0 0
      %1077 = vmatprep.subr.bf16.mxu0 0
      %1078 = vmatpush1.bf16.msra.mxu0 0
      %1079 = vmatprep.subr.bf16.mxu0 0
      %1080 = vmatpush1.bf16.msra.mxu0 0
      %1081 = vmatprep.subr.bf16.mxu0 0
      %1082 = vmatpush1.bf16.msra.mxu0 0
      %1083 = vmatprep.subr.bf16.mxu0 0
      %1084 = vmatpush1.bf16.msra.mxu0 0
      %1085 = vmatprep.subr.bf16.mxu0 0
      %1086 = vmatpush1.bf16.msra.mxu0 0
      %1087 = vmatprep.subr.bf16.mxu0 0
      %1088 = vmatpush1.bf16.msra.mxu0 0
      %1089 = vmatprep.subr.bf16.mxu0 0
      %1090 = vmatpush1.bf16.msra.mxu0 0
      %1091 = vmatprep.subr.bf16.mxu0 0
      %1092 = vmatpush1.bf16.msra.mxu0 0
      %1093 = vmatprep.subr.bf16.mxu0 0
      %1094 = vmatpush1.bf16.msra.mxu0 0
      %1095 = vmatprep.subr.bf16.mxu0 0
      %1096 = vmatpush1.bf16.msra.mxu0 0
      %1097 = vmatprep.subr.bf16.mxu0 0
      %1098 = vmatpush1.bf16.msra.mxu0 0
      %1099 = vmatprep.subr.bf16.mxu0 0
      %1100 = vmatpush1.bf16.msra.mxu0 0
      %1101 = vmatprep.subr.bf16.mxu0 0
      %1102 = vmatpush1.bf16.msra.mxu0 0
      %1103 = vmatprep.mubr.bf16.mxu0 0
      %1104 = vmatmul.mubr.bf16.gmra.mrb[0].mxu0 %v279
      %v1105 = vpop.f32.mrb[0].mxu0
      %v1106 = vadd.f32 %v265, %v1105
      %v1107 = vpop.f32.mrb[0].mxu0
      %v1108 = vpop.f32.mrb[0].mxu0
      %v1109 = vadd.f32 %v270, %v1108
      %v1110 = vpop.f32.mrb[0].mxu0
      %1111 = vdwg.mxu0
      %v1112 = vmax.f32 %v1106, 0.0
      %v1113 = vmax.f32 %v1109, 0.0
      %v1114 = vpack.c.bf16 %v1113, %v1112
      %1115 = vmatprep.subr.bf16.mxu0 0
      %1116 = vmatpush1.bf16.msra.mxu0 %v1114
      %1117 = vmatprep.subr.bf16.mxu0 0
      %1118 = vmatpush1.bf16.msra.mxu0 0
      %1119 = vmatprep.subr.bf16.mxu0 0
      %1120 = vmatpush1.bf16.msra.mxu0 0
      %1121 = vmatprep.subr.bf16.mxu0 0
      %1122 = vmatpush1.bf16.msra.mxu0 0
      %1123 = vmatprep.subr.bf16.mxu0 0
      %1124 = vmatpush1.bf16.msra.mxu0 0
      %1125 = vmatprep.subr.bf16.mxu0 0
      %1126 = vmatpush1.bf16.msra.mxu0 0
      %1127 = vmatprep.subr.bf16.mxu0 0
      %1128 = vmatpush1.bf16.msra.mxu0 0
      %1129 = vmatprep.subr.bf16.mxu0 0
      %1130 = vmatpush1.bf16.msra.mxu0 0
      %1131 = vmatprep.subr.bf16.mxu0 0
      %1132 = vmatpush1.bf16.msra.mxu0 0
      %1133 = vmatprep.subr.bf16.mxu0 0
      %1134 = vmatpush1.bf16.msra.mxu0 0
      %1135 = vmatprep.subr.bf16.mxu0 0
      %1136 = vmatpush1.bf16.msra.mxu0 0
      %1137 = vmatprep.subr.bf16.mxu0 0
      %1138 = vmatpush1.bf16.msra.mxu0 0
      %1139 = vmatprep.subr.bf16.mxu0 0
      %1140 = vmatpush1.bf16.msra.mxu0 0
      %1141 = vmatprep.subr.bf16.mxu0 0
      %1142 = vmatpush1.bf16.msra.mxu0 0
      %1143 = vmatprep.subr.bf16.mxu0 0
      %1144 = vmatpush1.bf16.msra.mxu0 0
      %1145 = vmatprep.subr.bf16.mxu0 0
      %1146 = vmatpush1.bf16.msra.mxu0 0
      %1147 = vmatprep.mubr.bf16.mxu0 0
      %1148 = vmatmul.mubr.bf16.gmra.mrb[0].mxu0 %v372
      %v1149 = vpop.f32.mrb[0].mxu0
      %v1150 = vadd.f32 %v343, %v1149
      %v1151 = vpop.f32.mrb[0].mxu0
      %v1152 = vpop.f32.mrb[0].mxu0
      %v1153 = vadd.f32 %v348, %v1152
      %v1154 = vpop.f32.mrb[0].mxu0
      %1155 = vmatprep.mubr.bf16.mxu0 0
      %1156 = vmatmul.mubr.bf16.gmra.mrb[0].mxu0 %v375
      %v1157 = vpop.f32.mrb[0].mxu0
      %v1158 = vadd.f32 %v353, %v1157
      %v1159 = vpop.f32.mrb[0].mxu0
      %v1160 = vpop.f32.mrb[0].mxu0
      %v1161 = vadd.f32 %v358, %v1160
      %v1162 = vpop.f32.mrb[0].mxu0
      %1163 = vdwg.mxu0
      %v1164 = vmax.f32 %v1150, 0.0
      %v1165 = vmax.f32 %v1153, 0.0
      %v1166 = vmax.f32 %v1158, 0.0
      %v1167 = vmax.f32 %v1161, 0.0
      %v1168 = vmax.f32 %v1062, %v1164
      %v1169 = vmax.f32 %v1063, %v1165
      %v1170 = vmax.f32 %v1064, %v1166
      %v1171 = vmax.f32 %v1065, %v1167
      %1172 = vst.msk [vmem:[%s255] sm:$0xff] %vm370, %v1168
      %1173 = vst.msk [vmem:[%s255 + $0x8] sm:$0xff] %vm370, %v1169
      %1174 = vst.msk [vmem:[%s255 + $0x10] sm:$0xff] %vm370, %v1170
      %1175 = vst.msk [vmem:[%s255 + $0x18] sm:$0xff] %vm370, %v1171
      %p1176 = scmp.lt.s32.totalorder %s20, 1
      %s1177 = scalar_select %p1176, %s20, 1
      %p1178 = scmp.lt.s32.totalorder %s21, 0
      %s1179 = scalar_select %p1178, %s21, 0
      %s1180 = smul.addr %s1177, 4
      %s1181 = sadd.s32 %s1179, %s1180
      %s1182 = smul.addr %s1181, 8
      %s1183 = scalar_lea.vmem %s5, %s1182
      // Predicated region
      $region41: #{tpu_custom_call.1} parent=39 // pred_check
        %p1184 = pneg %p160
      $region42: #{tpu_custom_call.1} parent=39 // pred_check_branch
        %1186 = sbr.rel (%p1184) target = $region44
      $region43: #{tpu_custom_call.1} parent=39 // pred_region
        _
      $region44: #{tpu_custom_call.1} parent=39 // pred_fallthru
        _
    $region40: #{tpu_custom_call.1} parent=5 // pred_fallthru
      _
    %p1187 = scmp.le.s32.totalorder 2, %s11
    // Predicated region
    $region45: #{tpu_custom_call.1} parent=5 // pred_check
      %p1188 = pneg %p1187
    $region46: #{tpu_custom_call.1} parent=5 // pred_check_branch
      %1190 = sbr.rel (%p1188) target = $region48
    $region47: #{tpu_custom_call.1} parent=5 // pred_region
      %s1191 = ssub.s32 %s11, 2
      // Predicated region
      $region49: #{tpu_custom_call.1} parent=47 // pred_check
        %p1192 = pneg %p166
      $region50: #{tpu_custom_call.1} parent=47 // pred_check_branch
        %1194 = sbr.rel (%p1192) target = $region52
      $region51: #{tpu_custom_call.1} parent=47 // pred_region
        %p1195 = scmp.lt.s32.totalorder %s22, 1
        %s1196 = scalar_select %p1195, %s22, 1
        %p1197 = scmp.lt.s32.totalorder %s23, 0
        %s1198 = scalar_select %p1197, %s23, 0
        %s1199 = smul.addr %s1196, 4
        %s1200 = sadd.s32 %s1198, %s1199
        %s1201 = smul.addr %s1200, 8
        %s1202 = scalar_lea.vmem %s5, %s1201
      $region52: #{tpu_custom_call.1} parent=47 // pred_fallthru
        _
    $region48: #{tpu_custom_call.1} parent=5 // pred_fallthru
      _
  $region6: #{tpu_custom_call.1} parent=0 // loop_footer
    %s15 = sadd.s32 1, %s11
  $region7: #{tpu_custom_call.1} parent=0 // loop_footer_branch
    %10 = sbr.rel target = $region3
  $region8: #{tpu_custom_call.1} parent=0 // loop_exit
    _

</llo_original>
